<compile_context>
chip_gen: v5e
topology: v5e:2x2
jax: 0.10.0
libtpu: 0.0.40
codegen_flags: <defaults>
</compile_context>

<pallas_src>
import functools

import jax
import jax.numpy as jnp
from jax.experimental import pallas as pl
from jax.experimental.pallas import tpu as pltpu

LRELU_SLOPE = 0.01   # nn.LeakyReLU default negative_slope
IN_EPS = 1e-5        # nn.InstanceNorm2d default eps


# ---------------------------------------------------------------------------
# Kernel
# ---------------------------------------------------------------------------

def _style_block_kernel(x_ref, p0_ref, p1_ref, n1_ref,
                        band0_ref, band1_ref, bias_ref, o_ref,
                        *, width, cout):
    bblk, hh, wcin = x_ref.shape
    wcout = o_ref.shape[2]
    bh = bblk * hh
    inv_hw = 1.0 / float(hh * width)

    bias = bias_ref[...]                                   # (2, W*Cout)

    # Row-within-image index: only needed to keep the H-shifted conv taps from
    # leaking across stacked batch elements (bblk > 1).
    local_row = None
    if bblk > 1:
        local_row = jax.lax.broadcasted_iota(jnp.int32, (bh, wcout), 0) % hh

    def conv_in_lrelu(h2, band_ref, bias_row):
        # 3x3 'same' conv: three block-banded MXU matmuls (W-direction zero
        # padding baked into the bands) sharing ONE LHS; the H-direction shift
        # / padding is applied to the matmul *outputs* (+ a batch-boundary
        # mask), so the LHS operand is never triplicated.
        t0 = jnp.dot(h2, band_ref[0], preferred_element_type=jnp.float32)
        t1 = jnp.dot(h2, band_ref[1], preferred_element_type=jnp.float32)
        t2 = jnp.dot(h2, band_ref[2], preferred_element_type=jnp.float32)
        zero_row = jnp.zeros((1, wcout), jnp.float32)
        t0 = jnp.concatenate([zero_row, t0[:bh - 1, :]], axis=0)   # out[r] += in[r-1]@B0
        t2 = jnp.concatenate([t2[1:, :], zero_row], axis=0)        # out[r] += in[r+1]@B2
        if local_row is not None:
            t0 = jnp.where(local_row == 0, 0.0, t0)
            t2 = jnp.where(local_row == hh - 1, 0.0, t2)
        acc = t0 + t1 + t2 + bias_row                              # (bh, W*Cout)

        # InstanceNorm2d(affine=False): per-(sample, channel) stats over H*W,
        # single pass (E[x^2]-E[x]^2, clamped >= 0).  Per-channel sums /
        # broadcasts via log2(W) circular lane roll-adds on the XLU slot
        # (replaces the old selector matmuls): every lane ends up holding the
        # full sum of its channel.
        acc3 = acc.reshape(bblk, hh, wcout)
        col_sum = jnp.sum(acc3, axis=1)                            # (bblk, W*Cout)
        col_sq = jnp.sum(acc3 * acc3, axis=1)
        shift = cout
        while shift < wcout:                                       # W is a power of 2
            col_sum = col_sum + pltpu.roll(col_sum, shift, axis=1)
            col_sq = col_sq + pltpu.roll(col_sq, shift, axis=1)
            shift *= 2
        mu = col_sum * inv_hw
        var = jnp.maximum(col_sq * inv_hw - mu * mu, 0.0)
        y = (acc3 - mu[:, None, :]) * jax.lax.rsqrt(var[:, None, :] + IN_EPS)
        return jnp.where(y >= 0, y, LRELU_SLOPE * y)               # (bblk, hh, W*Cout)

    # ---- Stage 0: InjectNoise0 (pre-folded into x) -> AdaIN0 -> conv0 block
    p0 = p0_ref[...]                                   # (bblk, 2, W*Cin): [mu; var]
    h = x_ref[...] * p0[:, 1:2, :] + p0[:, 0:1, :]
    h = conv_in_lrelu(h.reshape(bh, wcin), band0_ref, bias[0:1, :])

    # ---- Stage 1: InjectNoise1 (pre-scaled, lane-dense) -> AdaIN1 -> conv1 block
    p1 = p1_ref[...]                                   # (bblk, 2, W*Cout)
    h = (h + n1_ref[...]) * p1[:, 1:2, :] + p1[:, 0:1, :]
    h = conv_in_lrelu(h.reshape(bh, wcout), band1_ref, bias[1:2, :])

    o_ref[...] = h                                     # lane-dense (bblk, H, W*Cout)


# ---------------------------------------------------------------------------
# Parameters / packing (grid-invariant weights built once, not per call)
# ---------------------------------------------------------------------------

def init_params(key, indim, outdim, zdim):
    ks = jax.random.split(key, 8)
    p = {}
    p["conv0_w"] = 0.1 * jax.random.normal(ks[0], (3, 3, indim, outdim), jnp.float32)  # HWIO
    p["conv0_b"] = 0.1 * jax.random.normal(ks[1], (outdim,), jnp.float32)
    p["conv1_w"] = 0.1 * jax.random.normal(ks[2], (3, 3, outdim, outdim), jnp.float32)
    p["conv1_b"] = 0.1 * jax.random.normal(ks[3], (outdim,), jnp.float32)
    # PyTorch inits InjectNoise.w to zeros; nonzero here so the path is exercised.
    p["noise0_w"] = 0.1 * jax.random.normal(ks[4], (indim,), jnp.float32)
    p["noise1_w"] = 0.1 * jax.random.normal(ks[5], (outdim,), jnp.float32)
    # ModulationAdaIN linear stored as Linear.weight.T : (zdim, 2*fdim), no bias
    p["adain0_w"] = 0.1 * jax.random.normal(ks[6], (zdim, 2 * indim), jnp.float32)
    p["adain1_w"] = 0.1 * jax.random.normal(ks[7], (zdim, 2 * outdim), jnp.float32)
    return p


def _band_conv_weights(w_hwio, width):
    """(3,3,Cin,Cout) conv kernel -> (3, W*Cin, W*Cout) block-banded matrices.

    Band_kh[wi*Cin+ci, wo*Cout+co] = w[kh, wi-wo+1, ci, co] if |wi-wo|<=1 else 0,
    encoding the W-direction 'same' zero padding directly in the weights.
    (Only used because W*C is small here; switch to per-tap dense matmuls in a
    (rows, C) layout once C >= 128 — the band matrices scale as O((W*C)^2).)
    """
    mats = []
    for kh in range(3):
        m = jnp.zeros((width * w_hwio.shape[2], width * w_hwio.shape[3]), jnp.float32)
        for kw in range(3):
            m = m + jnp.kron(jnp.eye(width, k=1 - kw, dtype=jnp.float32), w_hwio[kh, kw])
        mats.append(m)
    return jnp.stack(mats, axis=0)


def pack_params(params, width):
    """Layout-transformed, grid-invariant weights; build once at prep time."""
    return {
        "band0": _band_conv_weights(params["conv0_w"], width),   # (3, W*Cin,  W*Cout)
        "band1": _band_conv_weights(params["conv1_w"], width),   # (3, W*Cout, W*Cout)
        "bias": jnp.stack([jnp.tile(params["conv0_b"], (width,)),
                           jnp.tile(params["conv1_b"], (width,))], axis=0),  # (2, W*Cout)
        "noise0_w": params["noise0_w"],
        "noise1_w": params["noise1_w"],
        "adain0_w": params["adain0_w"],
        "adain1_w": params["adain1_w"],
    }


def _pick_batch_block(batch, height, target_rows=128):
    """Largest divisor of `batch` whose stacked row count (bblk*H) fits the MXU
    M target, preferring >= 2 grid steps so the 'parallel' batch axis still
    feeds both TensorCores on a v7x-style part."""
    if height % 8 != 0:
        return 1
    divisors = [d for d in range(1, batch + 1)
                if batch % d == 0 and d * height <= target_rows]
    if not divisors:
        return 1
    multi_step = [d for d in divisors if batch // d >= 2]
    return max(multi_step) if multi_step else max(divisors)


# ---------------------------------------------------------------------------
# Forward wrapper
# ---------------------------------------------------------------------------

@jax.jit
def style_block_forward(x_nchw, s, noise0_nchw, noise1_nchw, packed):
    B, Cin, H, W = x_nchw.shape
    Cout = packed["bias"].shape[1] // W
    WCin, WCout = W * Cin, W * Cout
    assert W & (W - 1) == 0, "W must be a power of two (lane roll-add reduction)"

    # --- layout plumbing (cheap XLA elementwise/transpose; fuses) ---
    x = jnp.transpose(x_nchw, (0, 2, 3, 1)).astype(jnp.float32)          # NHWC
    n0 = noise0_nchw.reshape(B, H, W, 1).astype(jnp.float32)
    n1 = noise1_nchw.reshape(B, H, W, 1).astype(jnp.float32)
    # InjectNoise terms precomputed lane-dense; noise0 folded straight into x.
    x = (x + n0 * packed["noise0_w"].reshape(1, 1, 1, Cin)).reshape(B, H, WCin)
    n1w = (n1 * packed["noise1_w"].reshape(1, 1, 1, Cout)).reshape(B, H, WCout)

    # AdaIN style projections hoisted out of the kernel (one fused XLA matmul
    # each instead of M=1 MXU pushes per grid step); mu/var passed as separate
    # lane-dense rows so the kernel never slices a vreg mid-lane.
    def adain_rows(w, c):
        p = jnp.dot(s.astype(jnp.float32), w, precision=jax.lax.Precision.HIGHEST)
        return jnp.stack([jnp.tile(p[:, :c], (1, W)),        # mu  (additive)
                          jnp.tile(p[:, c:], (1, W))],        # var (multiplicative)
                         axis=1)                              # (B, 2, W*c)
    p0 = adain_rows(packed["adain0_w"], Cin)
    p1 = adain_rows(packed["adain1_w"], Cout)

    # --- grid: stack batch elements per step to fill the MXU M dimension ---
    bblk = _pick_batch_block(B, H)
    grid = (B // bblk,)

    kernel = functools.partial(_style_block_kernel, width=W, cout=Cout)

    out = pl.pallas_call(
        kernel,
        out_shape=jax.ShapeDtypeStruct((B, H, WCout), jnp.float32),
        grid_spec=pltpu.PrefetchScalarGridSpec(
            num_scalar_prefetch=0,
            grid=grid,
            in_specs=[
                pl.BlockSpec((bblk, H, WCin), lambda i: (i, 0, 0)),    # x (+noise0*w0)
                pl.BlockSpec((bblk, 2, WCin), lambda i: (i, 0, 0)),    # AdaIN0 [mu;var]
                pl.BlockSpec((bblk, 2, WCout), lambda i: (i, 0, 0)),   # AdaIN1 [mu;var]
                pl.BlockSpec((bblk, H, WCout), lambda i: (i, 0, 0)),   # noise1*w1
                pl.BlockSpec((3, WCin, WCout), lambda i: (0, 0, 0)),   # band0 (invariant)
                pl.BlockSpec((3, WCout, WCout), lambda i: (0, 0, 0)),  # band1 (invariant)
                pl.BlockSpec((2, WCout), lambda i: (0, 0)),            # conv biases
            ],
            out_specs=pl.BlockSpec((bblk, H, WCout), lambda i: (i, 0, 0)),
        ),
        compiler_params=pltpu.CompilerParams(
            dimension_semantics=("parallel",),       # independent batch blocks
            vmem_limit_bytes=32 * 1024 * 1024,       # safe on v5e/v6e/v7x at this size
        ),
    )(x, p0, p1, n1w, packed["band0"], packed["band1"], packed["bias"])

    # lane-dense (B, H, W*Cout) -> NCHW to match PyTorch
    return jnp.transpose(out.reshape(B, H, W, Cout), (0, 3, 1, 2))


# ---------------------------------------------------------------------------
# Pure-JAX reference (for correctness check)
# ---------------------------------------------------------------------------

def _reference_forward(x_nchw, s, n0_nchw, n1_nchw, params):
    prec = jax.lax.Precision.HIGHEST
    x = jnp.transpose(x_nchw, (0, 2, 3, 1))
    n0 = jnp.transpose(n0_nchw, (0, 2, 3, 1))
    n1 = jnp.transpose(n1_nchw, (0, 2, 3, 1))

    def adain(h, w):
        C = h.shape[-1]
        p = jnp.dot(s, w, precision=prec)                       # (B, 2C)
        mu = p[:, :C][:, None, None, :]
        var = p[:, C:][:, None, None, :]
        return h * var + mu

    def conv_block(h, w, b):
        y = jax.lax.conv_general_dilated(
            h, w, (1, 1), "SAME",
            dimension_numbers=("NHWC", "HWIO", "NHWC"), precision=prec) + b
        mu = jnp.mean(y, axis=(1, 2), keepdims=True)
        var = jnp.mean((y - mu) ** 2, axis=(1, 2), keepdims=True)
        y = (y - mu) * jax.lax.rsqrt(var + IN_EPS)
        return jnp.where(y >= 0, y, LRELU_SLOPE * y)

    h = x + n0 * params["noise0_w"].reshape(1, 1, 1, -1)
    h = adain(h, params["adain0_w"])
    h = conv_block(h, params["conv0_w"], params["conv0_b"])
    h = h + n1 * params["noise1_w"].reshape(1, 1, 1, -1)
    h = adain(h, params["adain1_w"])
    h = conv_block(h, params["conv1_w"], params["conv1_b"])
    return jnp.transpose(h, (0, 3, 1, 2))


if __name__ == "__main__":
    B, Cin, Cout, Z, H, W = 4, 4, 8, 8, 16, 16

    key = jax.random.PRNGKey(0)
    k_x, k_s, k_n0, k_n1, k_p = jax.random.split(key, 5)

    x = jax.random.normal(k_x, (B, Cin, H, W), jnp.float32)      # NCHW, like PyTorch
    s = jax.random.normal(k_s, (B, Z), jnp.float32)              # style vector
    noise0 = jax.random.normal(k_n0, (B, 1, H, W), jnp.float32)  # torch.randn equivalent
    noise1 = jax.random.normal(k_n1, (B, 1, H, W), jnp.float32)

    params = init_params(k_p, Cin, Cout, Z)
    packed = pack_params(params, W)          # grid-invariant weights, built once

    out = style_block_forward(x, s, noise0, noise1, packed)
    out = jax.block_until_ready(out)
    assert out.shape == (B, Cout, H, W), out.shape
    assert bool(jnp.all(jnp.isfinite(out)))

    # Note: kernel conv dots run at default TPU dot precision; the reference
    # uses Precision.HIGHEST, hence the moderate tolerance.
    ref = _reference_forward(x, s, noise0, noise1, params)
    max_err = float(jnp.max(jnp.abs(out - ref)))
    assert max_err < 5e-2, f"mismatch vs pure-JAX reference: {max_err}"

    print("KERNEL_OK")
</pallas_src>

<mosaic_0001>
module attributes {stable_mosaic.version = 11 : i64} {
  func.func @_style_block_kernel(%arg0: i32, %arg1: memref<2x16x64xf32, #tpu.memory_space<vmem>>, %arg2: memref<2x2x64xf32, #tpu.memory_space<vmem>>, %arg3: memref<2x2x128xf32, #tpu.memory_space<vmem>>, %arg4: memref<2x16x128xf32, #tpu.memory_space<vmem>>, %arg5: memref<3x64x128xf32, #tpu.memory_space<vmem>>, %arg6: memref<3x128x128xf32, #tpu.memory_space<vmem>>, %arg7: memref<2x128xf32, #tpu.memory_space<vmem>>, %arg8: memref<2x16x128xf32, #tpu.memory_space<vmem>>) attributes {dimension_semantics = [#tpu.dimension_semantics<parallel>], iteration_bounds = array<i64: 2>, scalar_prefetch = 0 : i64, scratch_operands = 0 : i64, tpu.core_type = #tpu.core_type<tc>, window_params = [{transform_indices = @transform_0, window_bounds = array<i64: 2, 16, 64>}, {transform_indices = @transform_1, window_bounds = array<i64: 2, 2, 64>}, {transform_indices = @transform_2, window_bounds = array<i64: 2, 2, 128>}, {transform_indices = @transform_3, window_bounds = array<i64: 2, 16, 128>}, {pipeline_mode = #tpu.pipeline_mode<synchronous>, transform_indices = @transform_4, window_bounds = array<i64: 3, 64, 128>}, {pipeline_mode = #tpu.pipeline_mode<synchronous>, transform_indices = @transform_5, window_bounds = array<i64: 3, 128, 128>}, {pipeline_mode = #tpu.pipeline_mode<synchronous>, transform_indices = @transform_6, window_bounds = array<i64: 2, 128>}, {transform_indices = @transform_7, window_bounds = array<i64: 2, 16, 128>}]} {
    %c0 = arith.constant 0 : index
    %c0_0 = arith.constant 0 : index
    %0 = vector.load %arg7[%c0, %c0_0] : memref<2x128xf32, #tpu.memory_space<vmem>>, vector<2x128xf32>
    %1 = tpu.iota {dimensions = array<i32: 0>} : vector<32x128xi32>
    %c16_i32 = arith.constant 16 : i32
    %c0_i32 = arith.constant 0 : i32
    %2 = arith.cmpi eq, %c16_i32, %c0_i32 : i32
    %c1_i32 = arith.constant 1 : i32
    %3 = arith.select %2, %c1_i32, %c16_i32 : i32
    %4 = vector.broadcast %3 : i32 to vector<32x128xi32>
    %5 = arith.remsi %1, %4 : vector<32x128xi32>
    %c0_i32_1 = arith.constant 0 : i32
    %6 = vector.broadcast %c0_i32_1 : i32 to vector<32x128xi32>
    %7 = arith.cmpi ne, %5, %6 : vector<32x128xi32>
    %c0_i32_2 = arith.constant 0 : i32
    %8 = vector.broadcast %c0_i32_2 : i32 to vector<32x128xi32>
    %9 = arith.cmpi slt, %5, %8 : vector<32x128xi32>
    %c0_i32_3 = arith.constant 0 : i32
    %10 = arith.cmpi slt, %3, %c0_i32_3 : i32
    %11 = vector.broadcast %10 : i1 to vector<32x128xi1>
    %12 = vector.broadcast %11 : vector<32x128xi1> to vector<32x128xi1>
    %13 = arith.xori %9, %12 : vector<32x128xi1>
    %14 = arith.andi %13, %7 : vector<32x128xi1>
    %15 = vector.broadcast %3 : i32 to vector<32x128xi32>
    %16 = arith.addi %5, %15 : vector<32x128xi32>
    %17 = arith.select %14, %16, %5 : vector<32x128xi1>, vector<32x128xi32>
    %c0_4 = arith.constant 0 : index
    %c0_5 = arith.constant 0 : index
    %c0_6 = arith.constant 0 : index
    %18 = vector.load %arg2[%c0_4, %c0_5, %c0_6] : memref<2x2x64xf32, #tpu.memory_space<vmem>>, vector<2x2x64xf32>
    %c0_7 = arith.constant 0 : index
    %c0_8 = arith.constant 0 : index
    %c0_9 = arith.constant 0 : index
    %19 = vector.load %arg1[%c0_7, %c0_8, %c0_9] : memref<2x16x64xf32, #tpu.memory_space<vmem>>, vector<2x16x64xf32>
    %20 = vector.extract_strided_slice %18 {offsets = [0, 1, 0], sizes = [2, 1, 64], strides = [1, 1, 1]} : vector<2x2x64xf32> to vector<2x1x64xf32>
    %21 = vector.broadcast %20 : vector<2x1x64xf32> to vector<2x16x64xf32>
    %22 = arith.mulf %19, %21 : vector<2x16x64xf32>
    %23 = vector.extract_strided_slice %18 {offsets = [0, 0, 0], sizes = [2, 1, 64], strides = [1, 1, 1]} : vector<2x2x64xf32> to vector<2x1x64xf32>
    %24 = vector.broadcast %23 : vector<2x1x64xf32> to vector<2x16x64xf32>
    %25 = arith.addf %22, %24 : vector<2x16x64xf32>
    %26 = vector.shape_cast %25 : vector<2x16x64xf32> to vector<32x64xf32>
    %27 = vector.extract_strided_slice %0 {offsets = [0, 0], sizes = [1, 128], strides = [1, 1]} : vector<2x128xf32> to vector<1x128xf32>
    %c0_10 = arith.constant 0 : index
    %c0_11 = arith.constant 0 : index
    %c0_12 = arith.constant 0 : index
    %28 = vector.load %arg5[%c0_10, %c0_11, %c0_12] : memref<3x64x128xf32, #tpu.memory_space<vmem>>, vector<1x64x128xf32>
    %29 = vector.shape_cast %28 : vector<1x64x128xf32> to vector<64x128xf32>
    %cst = arith.constant dense<0.000000e+00> : vector<32x128xf32>
    %30 = tpu.matmul %26, %29, %cst {dimension_numbers = #tpu.dot_dimension_numbers<[1], [0], [0], [1], [0, 0, 1, 1], [], []>} : vector<32x64xf32>, vector<64x128xf32>, vector<32x128xf32> -> vector<32x128xf32>
    %c1 = arith.constant 1 : index
    %c0_13 = arith.constant 0 : index
    %c0_14 = arith.constant 0 : index
    %31 = vector.load %arg5[%c1, %c0_13, %c0_14] : memref<3x64x128xf32, #tpu.memory_space<vmem>>, vector<1x64x128xf32>
    %32 = vector.shape_cast %31 : vector<1x64x128xf32> to vector<64x128xf32>
    %cst_15 = arith.constant dense<0.000000e+00> : vector<32x128xf32>
    %33 = tpu.matmul %26, %32, %cst_15 {dimension_numbers = #tpu.dot_dimension_numbers<[1], [0], [0], [1], [0, 0, 1, 1], [], []>} : vector<32x64xf32>, vector<64x128xf32>, vector<32x128xf32> -> vector<32x128xf32>
    %c2 = arith.constant 2 : index
    %c0_16 = arith.constant 0 : index
    %c0_17 = arith.constant 0 : index
    %34 = vector.load %arg5[%c2, %c0_16, %c0_17] : memref<3x64x128xf32, #tpu.memory_space<vmem>>, vector<1x64x128xf32>
    %35 = vector.shape_cast %34 : vector<1x64x128xf32> to vector<64x128xf32>
    %cst_18 = arith.constant dense<0.000000e+00> : vector<32x128xf32>
    %36 = tpu.matmul %26, %35, %cst_18 {dimension_numbers = #tpu.dot_dimension_numbers<[1], [0], [0], [1], [0, 0, 1, 1], [], []>} : vector<32x64xf32>, vector<64x128xf32>, vector<32x128xf32> -> vector<32x128xf32>
    %cst_19 = arith.constant 0.000000e+00 : f32
    %37 = vector.broadcast %cst_19 : f32 to vector<1x128xf32>
    %38 = vector.extract_strided_slice %30 {offsets = [0, 0], sizes = [31, 128], strides = [1, 1]} : vector<32x128xf32> to vector<31x128xf32>
    %39 = tpu.concatenate %37, %38 in 0 : vector<1x128xf32>, vector<31x128xf32> -> vector<32x128xf32>
    %40 = vector.extract_strided_slice %36 {offsets = [1, 0], sizes = [31, 128], strides = [1, 1]} : vector<32x128xf32> to vector<31x128xf32>
    %41 = tpu.concatenate %40, %37 in 0 : vector<31x128xf32>, vector<1x128xf32> -> vector<32x128xf32>
    %c0_i32_20 = arith.constant 0 : i32
    %42 = vector.broadcast %c0_i32_20 : i32 to vector<32x128xi32>
    %43 = arith.cmpi eq, %17, %42 : vector<32x128xi32>
    %cst_21 = arith.constant 0.000000e+00 : f32
    %44 = vector.broadcast %cst_21 : f32 to vector<32x128xf32>
    %45 = arith.select %43, %44, %39 : vector<32x128xi1>, vector<32x128xf32>
    %c15_i32 = arith.constant 15 : i32
    %46 = vector.broadcast %c15_i32 : i32 to vector<32x128xi32>
    %47 = arith.cmpi eq, %17, %46 : vector<32x128xi32>
    %cst_22 = arith.constant 0.000000e+00 : f32
    %48 = vector.broadcast %cst_22 : f32 to vector<32x128xf32>
    %49 = arith.select %47, %48, %41 : vector<32x128xi1>, vector<32x128xf32>
    %50 = arith.addf %45, %33 : vector<32x128xf32>
    %51 = arith.addf %50, %49 : vector<32x128xf32>
    %52 = vector.broadcast %27 : vector<1x128xf32> to vector<32x128xf32>
    %53 = arith.addf %51, %52 : vector<32x128xf32>
    %54 = vector.shape_cast %53 : vector<32x128xf32> to vector<2x16x128xf32>
    %cst_23 = arith.constant dense<0.000000e+00> : vector<2x128xf32>
    %55 = vector.multi_reduction <add>, %54, %cst_23 [1] : vector<2x16x128xf32> to vector<2x128xf32>
    %56 = arith.mulf %54, %54 : vector<2x16x128xf32>
    %cst_24 = arith.constant dense<0.000000e+00> : vector<2x128xf32>
    %57 = vector.multi_reduction <add>, %56, %cst_24 [1] : vector<2x16x128xf32> to vector<2x128xf32>
    %c8_i32 = arith.constant 8 : i32
    %58 = tpu.dynamic_rotate %55 by %c8_i32 dim 1 : vector<2x128xf32>, i32 -> vector<2x128xf32>
    %59 = arith.addf %55, %58 : vector<2x128xf32>
    %c8_i32_25 = arith.constant 8 : i32
    %60 = tpu.dynamic_rotate %57 by %c8_i32_25 dim 1 : vector<2x128xf32>, i32 -> vector<2x128xf32>
    %61 = arith.addf %57, %60 : vector<2x128xf32>
    %c16_i32_26 = arith.constant 16 : i32
    %62 = tpu.dynamic_rotate %59 by %c16_i32_26 dim 1 : vector<2x128xf32>, i32 -> vector<2x128xf32>
    %63 = arith.addf %59, %62 : vector<2x128xf32>
    %c16_i32_27 = arith.constant 16 : i32
    %64 = tpu.dynamic_rotate %61 by %c16_i32_27 dim 1 : vector<2x128xf32>, i32 -> vector<2x128xf32>
    %65 = arith.addf %61, %64 : vector<2x128xf32>
    %c32_i32 = arith.constant 32 : i32
    %66 = tpu.dynamic_rotate %63 by %c32_i32 dim 1 : vector<2x128xf32>, i32 -> vector<2x128xf32>
    %67 = arith.addf %63, %66 : vector<2x128xf32>
    %c32_i32_28 = arith.constant 32 : i32
    %68 = tpu.dynamic_rotate %65 by %c32_i32_28 dim 1 : vector<2x128xf32>, i32 -> vector<2x128xf32>
    %69 = arith.addf %65, %68 : vector<2x128xf32>
    %c64_i32 = arith.constant 64 : i32
    %70 = tpu.dynamic_rotate %67 by %c64_i32 dim 1 : vector<2x128xf32>, i32 -> vector<2x128xf32>
    %71 = arith.addf %67, %70 : vector<2x128xf32>
    %c64_i32_29 = arith.constant 64 : i32
    %72 = tpu.dynamic_rotate %69 by %c64_i32_29 dim 1 : vector<2x128xf32>, i32 -> vector<2x128xf32>
    %73 = arith.addf %69, %72 : vector<2x128xf32>
    %cst_30 = arith.constant 3.906250e-03 : f32
    %74 = vector.broadcast %cst_30 : f32 to vector<2x128xf32>
    %75 = arith.mulf %71, %74 : vector<2x128xf32>
    %cst_31 = arith.constant 3.906250e-03 : f32
    %76 = vector.broadcast %cst_31 : f32 to vector<2x128xf32>
    %77 = arith.mulf %73, %76 : vector<2x128xf32>
    %78 = arith.mulf %75, %75 : vector<2x128xf32>
    %79 = arith.subf %77, %78 : vector<2x128xf32>
    %cst_32 = arith.constant 0.000000e+00 : f32
    %80 = vector.broadcast %cst_32 : f32 to vector<2x128xf32>
    %81 = arith.maximumf %79, %80 : vector<2x128xf32>
    %82 = vector.shape_cast %75 : vector<2x128xf32> to vector<2x1x128xf32>
    %83 = vector.broadcast %82 : vector<2x1x128xf32> to vector<2x16x128xf32>
    %84 = arith.subf %54, %83 : vector<2x16x128xf32>
    %85 = vector.shape_cast %81 : vector<2x128xf32> to vector<2x1x128xf32>
    %cst_33 = arith.constant 9.99999974E-6 : f32
    %86 = vector.broadcast %cst_33 : f32 to vector<2x1x128xf32>
    %87 = arith.addf %85, %86 : vector<2x1x128xf32>
    %88 = math.rsqrt %87 : vector<2x1x128xf32>
    %89 = vector.broadcast %88 : vector<2x1x128xf32> to vector<2x16x128xf32>
    %90 = arith.mulf %84, %89 : vector<2x16x128xf32>
    %cst_34 = arith.constant 0.000000e+00 : f32
    %91 = vector.broadcast %cst_34 : f32 to vector<2x16x128xf32>
    %92 = arith.cmpf oge, %90, %91 : vector<2x16x128xf32>
    %cst_35 = arith.constant 0.00999999977 : f32
    %93 = vector.broadcast %cst_35 : f32 to vector<2x16x128xf32>
    %94 = arith.mulf %93, %90 : vector<2x16x128xf32>
    %95 = arith.select %92, %90, %94 : vector<2x16x128xi1>, vector<2x16x128xf32>
    %c0_36 = arith.constant 0 : index
    %c0_37 = arith.constant 0 : index
    %c0_38 = arith.constant 0 : index
    %96 = vector.load %arg3[%c0_36, %c0_37, %c0_38] : memref<2x2x128xf32, #tpu.memory_space<vmem>>, vector<2x2x128xf32>
    %c0_39 = arith.constant 0 : index
    %c0_40 = arith.constant 0 : index
    %c0_41 = arith.constant 0 : index
    %97 = vector.load %arg4[%c0_39, %c0_40, %c0_41] : memref<2x16x128xf32, #tpu.memory_space<vmem>>, vector<2x16x128xf32>
    %98 = arith.addf %95, %97 : vector<2x16x128xf32>
    %99 = vector.extract_strided_slice %96 {offsets = [0, 1, 0], sizes = [2, 1, 128], strides = [1, 1, 1]} : vector<2x2x128xf32> to vector<2x1x128xf32>
    %100 = vector.broadcast %99 : vector<2x1x128xf32> to vector<2x16x128xf32>
    %101 = arith.mulf %98, %100 : vector<2x16x128xf32>
    %102 = vector.extract_strided_slice %96 {offsets = [0, 0, 0], sizes = [2, 1, 128], strides = [1, 1, 1]} : vector<2x2x128xf32> to vector<2x1x128xf32>
    %103 = vector.broadcast %102 : vector<2x1x128xf32> to vector<2x16x128xf32>
    %104 = arith.addf %101, %103 : vector<2x16x128xf32>
    %105 = vector.shape_cast %104 : vector<2x16x128xf32> to vector<32x128xf32>
    %106 = vector.extract_strided_slice %0 {offsets = [1, 0], sizes = [1, 128], strides = [1, 1]} : vector<2x128xf32> to vector<1x128xf32>
    %c0_42 = arith.constant 0 : index
    %c0_43 = arith.constant 0 : index
    %c0_44 = arith.constant 0 : index
    %107 = vector.load %arg6[%c0_42, %c0_43, %c0_44] : memref<3x128x128xf32, #tpu.memory_space<vmem>>, vector<1x128x128xf32>
    %108 = vector.shape_cast %107 : vector<1x128x128xf32> to vector<128x128xf32>
    %cst_45 = arith.constant dense<0.000000e+00> : vector<32x128xf32>
    %109 = tpu.matmul %105, %108, %cst_45 {dimension_numbers = #tpu.dot_dimension_numbers<[1], [0], [0], [1], [0, 0, 1, 1], [], []>} : vector<32x128xf32>, vector<128x128xf32>, vector<32x128xf32> -> vector<32x128xf32>
    %c1_46 = arith.constant 1 : index
    %c0_47 = arith.constant 0 : index
    %c0_48 = arith.constant 0 : index
    %110 = vector.load %arg6[%c1_46, %c0_47, %c0_48] : memref<3x128x128xf32, #tpu.memory_space<vmem>>, vector<1x128x128xf32>
    %111 = vector.shape_cast %110 : vector<1x128x128xf32> to vector<128x128xf32>
    %cst_49 = arith.constant dense<0.000000e+00> : vector<32x128xf32>
    %112 = tpu.matmul %105, %111, %cst_49 {dimension_numbers = #tpu.dot_dimension_numbers<[1], [0], [0], [1], [0, 0, 1, 1], [], []>} : vector<32x128xf32>, vector<128x128xf32>, vector<32x128xf32> -> vector<32x128xf32>
    %c2_50 = arith.constant 2 : index
    %c0_51 = arith.constant 0 : index
    %c0_52 = arith.constant 0 : index
    %113 = vector.load %arg6[%c2_50, %c0_51, %c0_52] : memref<3x128x128xf32, #tpu.memory_space<vmem>>, vector<1x128x128xf32>
    %114 = vector.shape_cast %113 : vector<1x128x128xf32> to vector<128x128xf32>
    %cst_53 = arith.constant dense<0.000000e+00> : vector<32x128xf32>
    %115 = tpu.matmul %105, %114, %cst_53 {dimension_numbers = #tpu.dot_dimension_numbers<[1], [0], [0], [1], [0, 0, 1, 1], [], []>} : vector<32x128xf32>, vector<128x128xf32>, vector<32x128xf32> -> vector<32x128xf32>
    %cst_54 = arith.constant 0.000000e+00 : f32
    %116 = vector.broadcast %cst_54 : f32 to vector<1x128xf32>
    %117 = vector.extract_strided_slice %109 {offsets = [0, 0], sizes = [31, 128], strides = [1, 1]} : vector<32x128xf32> to vector<31x128xf32>
    %118 = tpu.concatenate %116, %117 in 0 : vector<1x128xf32>, vector<31x128xf32> -> vector<32x128xf32>
    %119 = vector.extract_strided_slice %115 {offsets = [1, 0], sizes = [31, 128], strides = [1, 1]} : vector<32x128xf32> to vector<31x128xf32>
    %120 = tpu.concatenate %119, %116 in 0 : vector<31x128xf32>, vector<1x128xf32> -> vector<32x128xf32>
    %c0_i32_55 = arith.constant 0 : i32
    %121 = vector.broadcast %c0_i32_55 : i32 to vector<32x128xi32>
    %122 = arith.cmpi eq, %17, %121 : vector<32x128xi32>
    %cst_56 = arith.constant 0.000000e+00 : f32
    %123 = vector.broadcast %cst_56 : f32 to vector<32x128xf32>
    %124 = arith.select %122, %123, %118 : vector<32x128xi1>, vector<32x128xf32>
    %c15_i32_57 = arith.constant 15 : i32
    %125 = vector.broadcast %c15_i32_57 : i32 to vector<32x128xi32>
    %126 = arith.cmpi eq, %17, %125 : vector<32x128xi32>
    %cst_58 = arith.constant 0.000000e+00 : f32
    %127 = vector.broadcast %cst_58 : f32 to vector<32x128xf32>
    %128 = arith.select %126, %127, %120 : vector<32x128xi1>, vector<32x128xf32>
    %129 = arith.addf %124, %112 : vector<32x128xf32>
    %130 = arith.addf %129, %128 : vector<32x128xf32>
    %131 = vector.broadcast %106 : vector<1x128xf32> to vector<32x128xf32>
    %132 = arith.addf %130, %131 : vector<32x128xf32>
    %133 = vector.shape_cast %132 : vector<32x128xf32> to vector<2x16x128xf32>
    %cst_59 = arith.constant dense<0.000000e+00> : vector<2x128xf32>
    %134 = vector.multi_reduction <add>, %133, %cst_59 [1] : vector<2x16x128xf32> to vector<2x128xf32>
    %135 = arith.mulf %133, %133 : vector<2x16x128xf32>
    %cst_60 = arith.constant dense<0.000000e+00> : vector<2x128xf32>
    %136 = vector.multi_reduction <add>, %135, %cst_60 [1] : vector<2x16x128xf32> to vector<2x128xf32>
    %c8_i32_61 = arith.constant 8 : i32
    %137 = tpu.dynamic_rotate %134 by %c8_i32_61 dim 1 : vector<2x128xf32>, i32 -> vector<2x128xf32>
    %138 = arith.addf %134, %137 : vector<2x128xf32>
    %c8_i32_62 = arith.constant 8 : i32
    %139 = tpu.dynamic_rotate %136 by %c8_i32_62 dim 1 : vector<2x128xf32>, i32 -> vector<2x128xf32>
    %140 = arith.addf %136, %139 : vector<2x128xf32>
    %c16_i32_63 = arith.constant 16 : i32
    %141 = tpu.dynamic_rotate %138 by %c16_i32_63 dim 1 : vector<2x128xf32>, i32 -> vector<2x128xf32>
    %142 = arith.addf %138, %141 : vector<2x128xf32>
    %c16_i32_64 = arith.constant 16 : i32
    %143 = tpu.dynamic_rotate %140 by %c16_i32_64 dim 1 : vector<2x128xf32>, i32 -> vector<2x128xf32>
    %144 = arith.addf %140, %143 : vector<2x128xf32>
    %c32_i32_65 = arith.constant 32 : i32
    %145 = tpu.dynamic_rotate %142 by %c32_i32_65 dim 1 : vector<2x128xf32>, i32 -> vector<2x128xf32>
    %146 = arith.addf %142, %145 : vector<2x128xf32>
    %c32_i32_66 = arith.constant 32 : i32
    %147 = tpu.dynamic_rotate %144 by %c32_i32_66 dim 1 : vector<2x128xf32>, i32 -> vector<2x128xf32>
    %148 = arith.addf %144, %147 : vector<2x128xf32>
    %c64_i32_67 = arith.constant 64 : i32
    %149 = tpu.dynamic_rotate %146 by %c64_i32_67 dim 1 : vector<2x128xf32>, i32 -> vector<2x128xf32>
    %150 = arith.addf %146, %149 : vector<2x128xf32>
    %c64_i32_68 = arith.constant 64 : i32
    %151 = tpu.dynamic_rotate %148 by %c64_i32_68 dim 1 : vector<2x128xf32>, i32 -> vector<2x128xf32>
    %152 = arith.addf %148, %151 : vector<2x128xf32>
    %cst_69 = arith.constant 3.906250e-03 : f32
    %153 = vector.broadcast %cst_69 : f32 to vector<2x128xf32>
    %154 = arith.mulf %150, %153 : vector<2x128xf32>
    %cst_70 = arith.constant 3.906250e-03 : f32
    %155 = vector.broadcast %cst_70 : f32 to vector<2x128xf32>
    %156 = arith.mulf %152, %155 : vector<2x128xf32>
    %157 = arith.mulf %154, %154 : vector<2x128xf32>
    %158 = arith.subf %156, %157 : vector<2x128xf32>
    %cst_71 = arith.constant 0.000000e+00 : f32
    %159 = vector.broadcast %cst_71 : f32 to vector<2x128xf32>
    %160 = arith.maximumf %158, %159 : vector<2x128xf32>
    %161 = vector.shape_cast %154 : vector<2x128xf32> to vector<2x1x128xf32>
    %162 = vector.broadcast %161 : vector<2x1x128xf32> to vector<2x16x128xf32>
    %163 = arith.subf %133, %162 : vector<2x16x128xf32>
    %164 = vector.shape_cast %160 : vector<2x128xf32> to vector<2x1x128xf32>
    %cst_72 = arith.constant 9.99999974E-6 : f32
    %165 = vector.broadcast %cst_72 : f32 to vector<2x1x128xf32>
    %166 = arith.addf %164, %165 : vector<2x1x128xf32>
    %167 = math.rsqrt %166 : vector<2x1x128xf32>
    %168 = vector.broadcast %167 : vector<2x1x128xf32> to vector<2x16x128xf32>
    %169 = arith.mulf %163, %168 : vector<2x16x128xf32>
    %cst_73 = arith.constant 0.000000e+00 : f32
    %170 = vector.broadcast %cst_73 : f32 to vector<2x16x128xf32>
    %171 = arith.cmpf oge, %169, %170 : vector<2x16x128xf32>
    %cst_74 = arith.constant 0.00999999977 : f32
    %172 = vector.broadcast %cst_74 : f32 to vector<2x16x128xf32>
    %173 = arith.mulf %172, %169 : vector<2x16x128xf32>
    %174 = arith.select %171, %169, %173 : vector<2x16x128xi1>, vector<2x16x128xf32>
    %c0_75 = arith.constant 0 : index
    %c0_76 = arith.constant 0 : index
    %c0_77 = arith.constant 0 : index
    %175 = vector.load %arg8[%c0_75, %c0_76, %c0_77] : memref<2x16x128xf32, #tpu.memory_space<vmem>>, vector<2x16x128xf32>
    tpu.vector_store %arg8[%c0_75, %c0_76, %c0_77], %174 {strides = array<i32>} : memref<2x16x128xf32, #tpu.memory_space<vmem>>, vector<2x16x128xf32>,
    return
  }
  func.func @transform_0(%arg0: i32) -> (i32, i32, i32) {
    %c0_i32 = arith.constant 0 : i32
    %c0_i32_0 = arith.constant 0 : i32
    %c0_i32_1 = arith.constant 0 : i32
    return %arg0, %c0_i32, %c0_i32_0 : i32, i32, i32
  }
  func.func @transform_1(%arg0: i32) -> (i32, i32, i32) {
    %c0_i32 = arith.constant 0 : i32
    %c0_i32_0 = arith.constant 0 : i32
    %c0_i32_1 = arith.constant 0 : i32
    return %arg0, %c0_i32, %c0_i32_0 : i32, i32, i32
  }
  func.func @transform_2(%arg0: i32) -> (i32, i32, i32) {
    %c0_i32 = arith.constant 0 : i32
    %c0_i32_0 = arith.constant 0 : i32
    %c0_i32_1 = arith.constant 0 : i32
    return %arg0, %c0_i32, %c0_i32_0 : i32, i32, i32
  }
  func.func @transform_3(%arg0: i32) -> (i32, i32, i32) {
    %c0_i32 = arith.constant 0 : i32
    %c0_i32_0 = arith.constant 0 : i32
    %c0_i32_1 = arith.constant 0 : i32
    return %arg0, %c0_i32, %c0_i32_0 : i32, i32, i32
  }
  func.func @transform_4(%arg0: i32) -> (i32, i32, i32) {
    %c0_i32 = arith.constant 0 : i32
    %c0_i32_0 = arith.constant 0 : i32
    %c0_i32_1 = arith.constant 0 : i32
    %c0_i32_2 = arith.constant 0 : i32
    return %c0_i32, %c0_i32_0, %c0_i32_1 : i32, i32, i32
  }
  func.func @transform_5(%arg0: i32) -> (i32, i32, i32) {
    %c0_i32 = arith.constant 0 : i32
    %c0_i32_0 = arith.constant 0 : i32
    %c0_i32_1 = arith.constant 0 : i32
    %c0_i32_2 = arith.constant 0 : i32
    return %c0_i32, %c0_i32_0, %c0_i32_1 : i32, i32, i32
  }
  func.func @transform_6(%arg0: i32) -> (i32, i32) {
    %c0_i32 = arith.constant 0 : i32
    %c0_i32_0 = arith.constant 0 : i32
    %c0_i32_1 = arith.constant 0 : i32
    return %c0_i32, %c0_i32_0 : i32, i32
  }
  func.func @transform_7(%arg0: i32) -> (i32, i32, i32) {
    %c0_i32 = arith.constant 0 : i32
    %c0_i32_0 = arith.constant 0 : i32
    %c0_i32_1 = arith.constant 0 : i32
    return %arg0, %c0_i32, %c0_i32_0 : i32, i32, i32
  }
}

</mosaic_0001>

<llo_original>
// kernel: style_block_forward.1
$region0: #{style_block_forward.1}
  #allocation0 [shape = 'u32[]', space=smem, size = 0x4, offset = 0x4, fixed_abs, tag = 'smem constant byte address 0x4 - core index']
  #allocation1 [shape = 'u32[72,128]{1,0:T(1,128)}', space=vmem, size = 0x9000, scoped, tag = 'internal scratch']
  %s0 = inlined_call_operand.vmem [shape: f32[4,16,64], index: 0, kind: input, shape index: {}]
  %s1 = inlined_call_operand.vmem [shape: f32[4,2,64], index: 1, kind: input, shape index: {}]
  %s2 = inlined_call_operand.vmem [shape: f32[4,2,128], index: 2, kind: input, shape index: {}]
  %s3 = inlined_call_operand.vmem [shape: f32[4,16,128], index: 3, kind: input, shape index: {}]
  %s4 = inlined_call_operand.vmem [shape: f32[3,64,128], index: 4, kind: input, shape index: {}]
  %s5 = inlined_call_operand.vmem [shape: f32[3,128,128], index: 5, kind: input, shape index: {}]
  %s6 = inlined_call_operand.vmem [shape: f32[2,128], index: 6, kind: input, shape index: {}]
  %s7 = inlined_call_operand.vmem [shape: f32[4,16,128], index: 7, kind: output, shape index: {}]
  %s8 = sld [smem:[#allocation0]]
  $region61: #{style_block_forward.1} parent=0
    _
  %s10 = ssub.s32 1, %s8
  %s11 = scalar_select 0, %s10, %s8
  loop: start=0, step=1, limit=4
  $region2: #{style_block_forward.1} parent=0 // loop_pre_header
    _
  $region3: #{style_block_forward.1} parent=0 // loop_header
    %s13 = sphi 0, %s17
    %p14 = scmp.ge.s32.totalorder %s13, 4
    %s23 = sphi 0, %s25
    %s26 = sphi 0, %s23
    %s27 = sphi 0, %s26
    %s43 = sphi 0, %s27
    %s49 = sphi 0, %s51
    %s52 = sphi 0, %s49
    %s53 = sphi 0, %s52
    %s69 = sphi 0, %s53
    %s75 = sphi 0, %s77
    %s78 = sphi 0, %s75
    %s79 = sphi 0, %s78
    %s95 = sphi 0, %s79
    %s101 = sphi 0, %s103
    %s104 = sphi 0, %s101
    %s105 = sphi 0, %s104
    %s121 = sphi 0, %s105
    %s125 = sphi 0, %s125
    %s127 = sphi 0, %s125
    %s128 = sphi 0, %s127
    %s142 = sphi 0, %s128
    %s146 = sphi 0, %s146
    %s148 = sphi 0, %s146
    %s149 = sphi 0, %s148
    %s163 = sphi 0, %s149
    %s167 = sphi 0, %s167
    %s169 = sphi 0, %s167
    %s170 = sphi 0, %s169
    %s184 = sphi 0, %s170
    %s190 = sphi 0, %s192
    %s193 = sphi 0, %s190
    %s194 = sphi 0, %s193
    %s210 = sphi 0, %s194
  $region4: #{style_block_forward.1} parent=0 // loop_header_branch
    %16 = sbr.rel (%p14) target = $region8
  $region5: #{style_block_forward.1} parent=0 // loop_body
    %s18 = ssub.s32 %s13, 1
    %s19 = ssub.s32 %s13, 2
    %s20 = sadd.s32 %s13, 1
    %s21 = ssub.s32 %s13, %s20
    %p22 = scmp.eq.s32.totalorder %s21, 0
    %s24 = sadd.s32 %s23, 1
    %s25 = scalar_select %p22, %s23, %s24
    %p28 = pneg %p22
    %p29 = scmp.eq.s32.totalorder %s13, 1
    %p30 = por %p28, %p29
    %p31 = scmp.ne.s32.totalorder %s23, %s26
    %p32 = scmp.eq.s32.totalorder %s13, 0
    %p33 = por %p31, %p32
    %p34 = scmp.ne.s32.totalorder %s23, %s26
    %p35 = scmp.eq.s32.totalorder %s18, 1
    %p36 = por %p34, %p35
    %p37 = scmp.ne.s32.totalorder %s26, %s27
    %p38 = scmp.eq.s32.totalorder %s18, 0
    %p39 = por %p37, %p38
    %p40 = scmp.ne.s32.totalorder %s26, %s27
    %p41 = scmp.eq.s32.totalorder %s19, 1
    %p42 = por %p40, %p41
    %p44 = scmp.ne.s32.totalorder %s27, %s43
    %p45 = scmp.eq.s32.totalorder %s19, 0
    %p46 = por %p44, %p45
    %s47 = ssub.s32 %s13, %s20
    %p48 = scmp.eq.s32.totalorder %s47, 0
    %s50 = sadd.s32 %s49, 1
    %s51 = scalar_select %p48, %s49, %s50
    %p54 = pneg %p48
    %p55 = scmp.eq.s32.totalorder %s13, 1
    %p56 = por %p54, %p55
    %p57 = scmp.ne.s32.totalorder %s49, %s52
    %p58 = scmp.eq.s32.totalorder %s13, 0
    %p59 = por %p57, %p58
    %p60 = scmp.ne.s32.totalorder %s49, %s52
    %p61 = scmp.eq.s32.totalorder %s18, 1
    %p62 = por %p60, %p61
    %p63 = scmp.ne.s32.totalorder %s52, %s53
    %p64 = scmp.eq.s32.totalorder %s18, 0
    %p65 = por %p63, %p64
    %p66 = scmp.ne.s32.totalorder %s52, %s53
    %p67 = scmp.eq.s32.totalorder %s19, 1
    %p68 = por %p66, %p67
    %p70 = scmp.ne.s32.totalorder %s53, %s69
    %p71 = scmp.eq.s32.totalorder %s19, 0
    %p72 = por %p70, %p71
    %s73 = ssub.s32 %s13, %s20
    %p74 = scmp.eq.s32.totalorder %s73, 0
    %s76 = sadd.s32 %s75, 1
    %s77 = scalar_select %p74, %s75, %s76
    %p80 = pneg %p74
    %p81 = scmp.eq.s32.totalorder %s13, 1
    %p82 = por %p80, %p81
    %p83 = scmp.ne.s32.totalorder %s75, %s78
    %p84 = scmp.eq.s32.totalorder %s13, 0
    %p85 = por %p83, %p84
    %p86 = scmp.ne.s32.totalorder %s75, %s78
    %p87 = scmp.eq.s32.totalorder %s18, 1
    %p88 = por %p86, %p87
    %p89 = scmp.ne.s32.totalorder %s78, %s79
    %p90 = scmp.eq.s32.totalorder %s18, 0
    %p91 = por %p89, %p90
    %p92 = scmp.ne.s32.totalorder %s78, %s79
    %p93 = scmp.eq.s32.totalorder %s19, 1
    %p94 = por %p92, %p93
    %p96 = scmp.ne.s32.totalorder %s79, %s95
    %p97 = scmp.eq.s32.totalorder %s19, 0
    %p98 = por %p96, %p97
    %s99 = ssub.s32 %s13, %s20
    %p100 = scmp.eq.s32.totalorder %s99, 0
    %s102 = sadd.s32 %s101, 1
    %s103 = scalar_select %p100, %s101, %s102
    %p106 = pneg %p100
    %p107 = scmp.eq.s32.totalorder %s13, 1
    %p108 = por %p106, %p107
    %p109 = scmp.ne.s32.totalorder %s101, %s104
    %p110 = scmp.eq.s32.totalorder %s13, 0
    %p111 = por %p109, %p110
    %p112 = scmp.ne.s32.totalorder %s101, %s104
    %p113 = scmp.eq.s32.totalorder %s18, 1
    %p114 = por %p112, %p113
    %p115 = scmp.ne.s32.totalorder %s104, %s105
    %p116 = scmp.eq.s32.totalorder %s18, 0
    %p117 = por %p115, %p116
    %p118 = scmp.ne.s32.totalorder %s104, %s105
    %p119 = scmp.eq.s32.totalorder %s19, 1
    %p120 = por %p118, %p119
    %p122 = scmp.ne.s32.totalorder %s105, %s121
    %p123 = scmp.eq.s32.totalorder %s19, 0
    %p124 = por %p122, %p123
    %s126 = sadd.s32 %s125, 1
    %p129 = scmp.eq.s32.totalorder %s13, 1
    %p130 = scmp.ne.s32.totalorder %s125, %s127
    %p131 = scmp.eq.s32.totalorder %s13, 0
    %p132 = por %p130, %p131
    %p133 = scmp.ne.s32.totalorder %s125, %s127
    %p134 = scmp.eq.s32.totalorder %s18, 1
    %p135 = por %p133, %p134
    %p136 = scmp.ne.s32.totalorder %s127, %s128
    %p137 = scmp.eq.s32.totalorder %s18, 0
    %p138 = por %p136, %p137
    %p139 = scmp.ne.s32.totalorder %s127, %s128
    %p140 = scmp.eq.s32.totalorder %s19, 1
    %p141 = por %p139, %p140
    %p143 = scmp.ne.s32.totalorder %s128, %s142
    %p144 = scmp.eq.s32.totalorder %s19, 0
    %p145 = por %p143, %p144
    %s147 = sadd.s32 %s146, 1
    %p150 = scmp.eq.s32.totalorder %s13, 1
    %p151 = scmp.ne.s32.totalorder %s146, %s148
    %p152 = scmp.eq.s32.totalorder %s13, 0
    %p153 = por %p151, %p152
    %p154 = scmp.ne.s32.totalorder %s146, %s148
    %p155 = scmp.eq.s32.totalorder %s18, 1
    %p156 = por %p154, %p155
    %p157 = scmp.ne.s32.totalorder %s148, %s149
    %p158 = scmp.eq.s32.totalorder %s18, 0
    %p159 = por %p157, %p158
    %p160 = scmp.ne.s32.totalorder %s148, %s149
    %p161 = scmp.eq.s32.totalorder %s19, 1
    %p162 = por %p160, %p161
    %p164 = scmp.ne.s32.totalorder %s149, %s163
    %p165 = scmp.eq.s32.totalorder %s19, 0
    %p166 = por %p164, %p165
    %s168 = sadd.s32 %s167, 1
    %p171 = scmp.eq.s32.totalorder %s13, 1
    %p172 = scmp.ne.s32.totalorder %s167, %s169
    %p173 = scmp.eq.s32.totalorder %s13, 0
    %p174 = por %p172, %p173
    %p175 = scmp.ne.s32.totalorder %s167, %s169
    %p176 = scmp.eq.s32.totalorder %s18, 1
    %p177 = por %p175, %p176
    %p178 = scmp.ne.s32.totalorder %s169, %s170
    %p179 = scmp.eq.s32.totalorder %s18, 0
    %p180 = por %p178, %p179
    %p181 = scmp.ne.s32.totalorder %s169, %s170
    %p182 = scmp.eq.s32.totalorder %s19, 1
    %p183 = por %p181, %p182
    %p185 = scmp.ne.s32.totalorder %s170, %s184
    %p186 = scmp.eq.s32.totalorder %s19, 0
    %p187 = por %p185, %p186
    %s188 = ssub.s32 %s13, %s20
    %p189 = scmp.eq.s32.totalorder %s188, 0
    %s191 = sadd.s32 %s190, 1
    %s192 = scalar_select %p189, %s190, %s191
    %p195 = pneg %p189
    %p196 = scmp.eq.s32.totalorder %s13, 1
    %p197 = por %p195, %p196
    %p198 = scmp.ne.s32.totalorder %s190, %s193
    %p199 = scmp.eq.s32.totalorder %s13, 0
    %p200 = por %p198, %p199
    %p201 = scmp.ne.s32.totalorder %s190, %s193
    %p202 = scmp.eq.s32.totalorder %s18, 1
    %p203 = por %p201, %p202
    %p204 = scmp.ne.s32.totalorder %s193, %s194
    %p205 = scmp.eq.s32.totalorder %s18, 0
    %p206 = por %p204, %p205
    %p207 = scmp.ne.s32.totalorder %s193, %s194
    %p208 = scmp.eq.s32.totalorder %s19, 1
    %p209 = por %p207, %p208
    %p211 = scmp.ne.s32.totalorder %s194, %s210
    %p212 = scmp.eq.s32.totalorder %s19, 0
    %p213 = por %p211, %p212
    %p214 = scmp.le.s32.totalorder 1, %s13
    %p215 = scmp.lt.s32.totalorder %s13, 3
    %p216 = pnand %p214, %p215
    %p217 = pneg %p216
    // Predicated region
    $region9: #{style_block_forward.1} parent=5 // pred_check
      _
    $region10: #{style_block_forward.1} parent=5 // pred_check_branch
      %219 = sbr.rel (%p216) target = $region12
    $region11: #{style_block_forward.1} parent=5 // pred_region
      %s220 = ssub.s32 %s13, 1
      // Predicated region
      $region13: #{style_block_forward.1} parent=11 // pred_check
        %p221 = pneg %p138
      $region14: #{style_block_forward.1} parent=11 // pred_check_branch
        %223 = sbr.rel (%p221) target = $region16
      $region15: #{style_block_forward.1} parent=11 // pred_region
        _
      $region16: #{style_block_forward.1} parent=11 // pred_fallthru
        _
      // Predicated region
      $region17: #{style_block_forward.1} parent=11 // pred_check
        %p224 = pneg %p159
      $region18: #{style_block_forward.1} parent=11 // pred_check_branch
        %226 = sbr.rel (%p224) target = $region20
      $region19: #{style_block_forward.1} parent=11 // pred_region
        _
      $region20: #{style_block_forward.1} parent=11 // pred_fallthru
        _
      // Predicated region
      $region21: #{style_block_forward.1} parent=11 // pred_check
        %p227 = pneg %p180
      $region22: #{style_block_forward.1} parent=11 // pred_check_branch
        %229 = sbr.rel (%p227) target = $region24
      $region23: #{style_block_forward.1} parent=11 // pred_region
        _
      $region24: #{style_block_forward.1} parent=11 // pred_fallthru
        _
    $region12: #{style_block_forward.1} parent=5 // pred_fallthru
      _
    %p230 = scmp.lt.s32.totalorder %s13, 2
    // Predicated region
    $region25: #{style_block_forward.1} parent=5 // pred_check
      %p231 = pneg %p230
    $region26: #{style_block_forward.1} parent=5 // pred_check_branch
      %233 = sbr.rel (%p231) target = $region28
    $region27: #{style_block_forward.1} parent=5 // pred_region
      // Predicated region
      $region29: #{style_block_forward.1} parent=27 // pred_check
        %p234 = pneg %p33
      $region30: #{style_block_forward.1} parent=27 // pred_check_branch
        %236 = sbr.rel (%p234) target = $region32
      $region31: #{style_block_forward.1} parent=27 // pred_region
        %s237 = smul.u32 2, %s13
        %p238 = scmp.lt.s32.totalorder %s237, 3
        %s239 = scalar_select %p238, %s237, 3
        %s240 = smul.addr %s239, 2
        %s241 = smul.addr %s240, 8
        %s242 = scalar_lea.vmem %s0, %s241
        %s243 = smul.u32 2, %s13
      $region32: #{style_block_forward.1} parent=27 // pred_fallthru
        _
      // Predicated region
      $region33: #{style_block_forward.1} parent=27 // pred_check
        %p244 = pneg %p59
      $region34: #{style_block_forward.1} parent=27 // pred_check_branch
        %246 = sbr.rel (%p244) target = $region36
      $region35: #{style_block_forward.1} parent=27 // pred_region
        %s247 = smul.u32 2, %s13
        %p248 = scmp.lt.s32.totalorder %s247, 3
        %s249 = scalar_select %p248, %s247, 3
        %s250 = smul.addr %s249, 2
        %s251 = scalar_lea.vmem %s1, %s250
        %s252 = smul.u32 2, %s13
      $region36: #{style_block_forward.1} parent=27 // pred_fallthru
        _
      // Predicated region
      $region37: #{style_block_forward.1} parent=27 // pred_check
        %p253 = pneg %p85
      $region38: #{style_block_forward.1} parent=27 // pred_check_branch
        %255 = sbr.rel (%p253) target = $region40
      $region39: #{style_block_forward.1} parent=27 // pred_region
        %s256 = smul.u32 2, %s13
        %p257 = scmp.lt.s32.totalorder %s256, 3
        %s258 = scalar_select %p257, %s256, 3
        %s259 = smul.addr %s258, 2
        %s260 = scalar_lea.vmem %s2, %s259
        %s261 = smul.u32 2, %s13
      $region40: #{style_block_forward.1} parent=27 // pred_fallthru
        _
      // Predicated region
      $region41: #{style_block_forward.1} parent=27 // pred_check
        %p262 = pneg %p111
      $region42: #{style_block_forward.1} parent=27 // pred_check_branch
        %264 = sbr.rel (%p262) target = $region44
      $region43: #{style_block_forward.1} parent=27 // pred_region
        %s265 = smul.u32 2, %s13
        %p266 = scmp.lt.s32.totalorder %s265, 3
        %s267 = scalar_select %p266, %s265, 3
        %s268 = smul.addr %s267, 2
        %s269 = smul.addr %s268, 8
        %s270 = scalar_lea.vmem %s3, %s269
        %s271 = smul.u32 2, %s13
      $region44: #{style_block_forward.1} parent=27 // pred_fallthru
        _
    $region28: #{style_block_forward.1} parent=5 // pred_fallthru
      _
    %p272 = scmp.le.s32.totalorder 1, %s13
    %p273 = scmp.lt.s32.totalorder %s13, 3
    %p274 = pnand %p272, %p273
    %p275 = pneg %p274
    // Predicated region
    $region45: #{style_block_forward.1} parent=5 // pred_check
      _
    $region46: #{style_block_forward.1} parent=5 // pred_check_branch
      %277 = sbr.rel (%p274) target = $region48
    $region47: #{style_block_forward.1} parent=5 // pred_region
      %s278 = ssub.s32 %s13, 1
      %s279 = smul.u32 2, %s18
      %p280 = scmp.lt.s32.totalorder %s279, 3
      %s281 = scalar_select %p280, %s279, 3
      %s282 = smul.addr %s281, 2
      %s283 = smul.addr %s282, 8
      %s284 = scalar_lea.vmem %s0, %s283
      %p285 = pneg %p39
      %p286 = pneg %p36
      %s287 = smul.u32 2, %s18
      %p288 = scmp.lt.s32.totalorder %s287, 3
      %s289 = scalar_select %p288, %s287, 3
      %s290 = smul.addr %s289, 2
      %s291 = scalar_lea.vmem %s1, %s290
      %p292 = pneg %p65
      %p293 = pneg %p62
      %s294 = smul.u32 2, %s18
      %p295 = scmp.lt.s32.totalorder %s294, 3
      %s296 = scalar_select %p295, %s294, 3
      %s297 = smul.addr %s296, 2
      %s298 = scalar_lea.vmem %s2, %s297
      %p299 = pneg %p91
      %p300 = pneg %p88
      %s301 = smul.u32 2, %s18
      %p302 = scmp.lt.s32.totalorder %s301, 3
      %s303 = scalar_select %p302, %s301, 3
      %s304 = smul.addr %s303, 2
      %s305 = smul.addr %s304, 8
      %s306 = scalar_lea.vmem %s3, %s305
      %p307 = pneg %p117
      %p308 = pneg %p114
      %p309 = pneg %p138
      %p310 = pneg %p135
      %p311 = pneg %p159
      %p312 = pneg %p156
      %p313 = pneg %p180
      %p314 = pneg %p177
      %p315 = pneg %p206
      %p316 = pneg %p203
      %s317 = smul.u32 2, %s18
      %p318 = scmp.lt.s32.totalorder %s317, 3
      %s319 = scalar_select %p318, %s317, 3
      %s320 = smul.addr %s319, 2
      %s321 = smul.addr %s320, 8
      %s322 = scalar_lea.vmem %s7, %s321
      %s323 = smul.u32 2, %s18
      %p324 = scmp.lt.s32.totalorder %s323, 3
      %s325 = scalar_select %p324, %s323, 3
      %s326 = smul.addr %s325, 2
      %s327 = smul.addr %s326, 8
      %s328 = scalar_lea.vmem %s0, %s327
      %s329 = smul.u32 2, %s18
      %s330 = smul.u32 2, %s18
      %p331 = scmp.lt.s32.totalorder %s330, 3
      %s332 = scalar_select %p331, %s330, 3
      %s333 = smul.addr %s332, 2
      %s334 = scalar_lea.vmem %s1, %s333
      %s335 = smul.u32 2, %s18
      %s336 = smul.u32 2, %s18
      %p337 = scmp.lt.s32.totalorder %s336, 3
      %s338 = scalar_select %p337, %s336, 3
      %s339 = smul.addr %s338, 2
      %s340 = scalar_lea.vmem %s2, %s339
      %s341 = smul.u32 2, %s18
      %s342 = smul.u32 2, %s18
      %p343 = scmp.lt.s32.totalorder %s342, 3
      %s344 = scalar_select %p343, %s342, 3
      %s345 = smul.addr %s344, 2
      %s346 = smul.addr %s345, 8
      %s347 = scalar_lea.vmem %s3, %s346
      %s348 = smul.u32 2, %s18
      %s349 = smul.u32 2, %s18
      %p350 = scmp.lt.s32.totalorder %s349, 3
      %s351 = scalar_select %p350, %s349, 3
      %s352 = smul.addr %s351, 2
      %s353 = smul.addr %s352, 8
      %s354 = scalar_lea.vmem %s7, %s353
      %s355 = smul.u32 2, %s18
      %v356 = vld [vmem:[%s6] sm:$0x3]
      %v357 = vlaneseq
      %v358 = vshrl.u32 %v357, 7
      %v359 = vadd.s32 %v358, 8
      %v360 = vadd.s32 %v358, 16
      %v361 = vadd.s32 %v358, 24
      %vm362 = vcmp.lt.s32.totalorder %v358, 0
      %v363 = vsub.s32 0, %v358
      %v364 = vsel %vm362, %v363, %v358
      %v365 = vshrl.u32 %v364, 4
      %v366 = vand.u32 %v364, 15
      %v367 = vsub.s32 0, %v366
      %v368 = vsel %vm362, %v367, %v366
      %vm369 = vcmp.lt.s32.totalorder %v359, 0
      %v370 = vsub.s32 0, %v359
      %v371 = vsel %vm369, %v370, %v359
      %v372 = vshrl.u32 %v371, 4
      %v373 = vand.u32 %v371, 15
      %v374 = vsub.s32 0, %v373
      %v375 = vsel %vm369, %v374, %v373
      %vm376 = vcmp.lt.s32.totalorder %v360, 0
      %v377 = vsub.s32 0, %v360
      %v378 = vsel %vm376, %v377, %v360
      %v379 = vshrl.u32 %v378, 4
      %v380 = vand.u32 %v378, 15
      %v381 = vsub.s32 0, %v380
      %v382 = vsel %vm376, %v381, %v380
      %vm383 = vcmp.lt.s32.totalorder %v361, 0
      %v384 = vsub.s32 0, %v361
      %v385 = vsel %vm383, %v384, %v361
      %v386 = vshrl.u32 %v385, 4
      %v387 = vand.u32 %v385, 15
      %v388 = vsub.s32 0, %v387
      %v389 = vsel %vm383, %v388, %v387
      %vm390 = vcmp.ne.s32.totalorder %v368, 0
      %vm391 = vcmp.ne.s32.totalorder %v375, 0
      %vm392 = vcmp.ne.s32.totalorder %v382, 0
      %vm393 = vcmp.ne.s32.totalorder %v389, 0
      %vm394 = vcmp.lt.s32.totalorder %v368, 0
      %vm395 = vcmp.lt.s32.totalorder %v375, 0
      %vm396 = vcmp.lt.s32.totalorder %v382, 0
      %vm397 = vcmp.lt.s32.totalorder %v389, 0
      %vm398 = vmand %vm394, %vm390
      %vm399 = vmand %vm395, %vm391
      %vm400 = vmand %vm396, %vm392
      %vm401 = vmand %vm397, %vm393
      %v402 = vadd.s32 %v368, 16
      %v403 = vadd.s32 %v375, 16
      %v404 = vadd.s32 %v382, 16
      %v405 = vadd.s32 %v389, 16
      %v406 = vsel %vm398, %v402, %v368
      %v407 = vsel %vm399, %v403, %v375
      %v408 = vsel %vm400, %v404, %v382
      %v409 = vsel %vm401, %v405, %v389
      %v410 = vld [vmem:[%s334] sm:$0x3]
      %v411 = vld [vmem:[%s334 + $0x2] sm:$0x3]
      %v412 = vld [vmem:[%s328] sm:$0xff]
      %v413 = vld [vmem:[%s328 + $0x8] sm:$0xff]
      %v414 = vld [vmem:[%s328 + $0x10] sm:$0xff]
      %v415 = vld [vmem:[%s328 + $0x18] sm:$0xff]
      %v416 = vperm.slane %v410, 1
      %v417 = vperm.slane %v411, 1
      %v418 = vmul.f32 %v412, %v416
      %v419 = vmul.f32 %v413, %v416
      %v420 = vmul.f32 %v414, %v417
      %v421 = vmul.f32 %v415, %v417
      %v422 = vperm.slane %v410, 0
      %v423 = vperm.slane %v411, 0
      %v424 = vadd.f32 %v418, %v422
      %v425 = vadd.f32 %v419, %v422
      %v426 = vadd.f32 %v420, %v423
      %v427 = vadd.f32 %v421, %v423
      %v428 = vld [vmem:[%s4] sm:$0xff]
      %v429 = vld [vmem:[%s4 + $0x8] sm:$0xff]
      %v430 = vld [vmem:[%s4 + $0x10] sm:$0xff]
      %v431 = vld [vmem:[%s4 + $0x18] sm:$0xff]
      %v432 = vld [vmem:[%s4 + $0x20] sm:$0xff]
      %v433 = vld [vmem:[%s4 + $0x28] sm:$0xff]
      %v434 = vld [vmem:[%s4 + $0x30] sm:$0xff]
      %v435 = vld [vmem:[%s4 + $0x38] sm:$0xff]
      %vm436 = vcmask 523264
      %v438 = vsel %vm436, %v424, 0
      %v441 = vsel %vm436, %v425, 0
      %v444 = vsel %vm436, %v426, 0
      %v447 = vsel %vm436, %v427, 0
      %449 = vmatpush.msra.mxu0 0.0
      %450 = vmatpush.msra.mxu0 0.0
      %451 = vmatpush.msra.mxu0 0.0
      %452 = vmatpush.msra.mxu0 0.0
      %453 = vmatpush.msra.mxu0 0.0
      %454 = vmatpush.msra.mxu0 0.0
      %455 = vmatpush.msra.mxu0 0.0
      %456 = vmatpush.msra.mxu0 0.0
      %457 = vmatpush.msra.mxu0 %v435
      %458 = vmatpush.msra.mxu0 %v434
      %459 = vmatpush.msra.mxu0 %v433
      %460 = vmatpush.msra.mxu0 %v432
      %461 = vmatpush.msra.mxu0 %v431
      %462 = vmatpush.msra.mxu0 %v430
      %463 = vmatpush.msra.mxu0 %v429
      %464 = vmatpush.msra.mxu0 %v428
      %465 = vmatmul.f32.gmra.mxu0 %v438
      %v466 = vpop.f32.mrf.mxu0
      %v467 = vadd.f32 0.0, %v466
      %468 = vmatmul.f32.gmra.mxu0 %v441
      %v469 = vpop.f32.mrf.mxu0
      %v470 = vadd.f32 0.0, %v469
      %471 = vmatmul.f32.gmra.mxu0 %v444
      %v472 = vpop.f32.mrf.mxu0
      %v473 = vadd.f32 0.0, %v472
      %474 = vmatmul.f32.gmra.mxu0 %v447
      %v475 = vpop.f32.mrf.mxu0
      %v476 = vadd.f32 0.0, %v475
      %477 = vdwg.mxu0
      %s478 = scalar_lea.vmem %s4, 64
      %v479 = vld [vmem:[%s478] sm:$0xff]
      %v480 = vld [vmem:[%s478 + $0x8] sm:$0xff]
      %v481 = vld [vmem:[%s478 + $0x10] sm:$0xff]
      %v482 = vld [vmem:[%s478 + $0x18] sm:$0xff]
      %v483 = vld [vmem:[%s478 + $0x20] sm:$0xff]
      %v484 = vld [vmem:[%s478 + $0x28] sm:$0xff]
      %v485 = vld [vmem:[%s478 + $0x30] sm:$0xff]
      %v486 = vld [vmem:[%s478 + $0x38] sm:$0xff]
      %487 = vmatpush.msra.mxu0 0.0
      %488 = vmatpush.msra.mxu0 0.0
      %489 = vmatpush.msra.mxu0 0.0
      %490 = vmatpush.msra.mxu0 0.0
      %491 = vmatpush.msra.mxu0 0.0
      %492 = vmatpush.msra.mxu0 0.0
      %493 = vmatpush.msra.mxu0 0.0
      %494 = vmatpush.msra.mxu0 0.0
      %495 = vmatpush.msra.mxu0 %v486
      %496 = vmatpush.msra.mxu0 %v485
      %497 = vmatpush.msra.mxu0 %v484
      %498 = vmatpush.msra.mxu0 %v483
      %499 = vmatpush.msra.mxu0 %v482
      %500 = vmatpush.msra.mxu0 %v481
      %501 = vmatpush.msra.mxu0 %v480
      %502 = vmatpush.msra.mxu0 %v479
      %503 = vmatmul.f32.gmra.mxu0 %v438
      %v504 = vpop.f32.mrf.mxu0
      %v505 = vadd.f32 0.0, %v504
      %506 = vmatmul.f32.gmra.mxu0 %v441
      %v507 = vpop.f32.mrf.mxu0
      %v508 = vadd.f32 0.0, %v507
      %509 = vmatmul.f32.gmra.mxu0 %v444
      %v510 = vpop.f32.mrf.mxu0
      %v511 = vadd.f32 0.0, %v510
      %512 = vmatmul.f32.gmra.mxu0 %v447
      %v513 = vpop.f32.mrf.mxu0
      %v514 = vadd.f32 0.0, %v513
      %515 = vdwg.mxu0
      %s516 = scalar_lea.vmem %s4, 128
      %v517 = vld [vmem:[%s516] sm:$0xff]
      %v518 = vld [vmem:[%s516 + $0x8] sm:$0xff]
      %v519 = vld [vmem:[%s516 + $0x10] sm:$0xff]
      %v520 = vld [vmem:[%s516 + $0x18] sm:$0xff]
      %v521 = vld [vmem:[%s516 + $0x20] sm:$0xff]
      %v522 = vld [vmem:[%s516 + $0x28] sm:$0xff]
      %v523 = vld [vmem:[%s516 + $0x30] sm:$0xff]
      %v524 = vld [vmem:[%s516 + $0x38] sm:$0xff]
      %525 = vmatpush.msra.mxu0 0.0
      %526 = vmatpush.msra.mxu0 0.0
      %527 = vmatpush.msra.mxu0 0.0
      %528 = vmatpush.msra.mxu0 0.0
      %529 = vmatpush.msra.mxu0 0.0
      %530 = vmatpush.msra.mxu0 0.0
      %531 = vmatpush.msra.mxu0 0.0
      %532 = vmatpush.msra.mxu0 0.0
      %533 = vmatpush.msra.mxu0 %v524
      %534 = vmatpush.msra.mxu0 %v523
      %535 = vmatpush.msra.mxu0 %v522
      %536 = vmatpush.msra.mxu0 %v521
      %537 = vmatpush.msra.mxu0 %v520
      %538 = vmatpush.msra.mxu0 %v519
      %539 = vmatpush.msra.mxu0 %v518
      %540 = vmatpush.msra.mxu0 %v517
      %541 = vmatmul.f32.gmra.mxu0 %v438
      %v542 = vpop.f32.mrf.mxu0
      %v543 = vadd.f32 0.0, %v542
      %544 = vmatmul.f32.gmra.mxu0 %v441
      %v545 = vpop.f32.mrf.mxu0
      %v546 = vadd.f32 0.0, %v545
      %547 = vmatmul.f32.gmra.mxu0 %v444
      %v548 = vpop.f32.mrf.mxu0
      %v549 = vadd.f32 0.0, %v548
      %550 = vmatmul.f32.gmra.mxu0 %v447
      %v551 = vpop.f32.mrf.mxu0
      %v552 = vadd.f32 0.0, %v551
      %553 = vdwg.mxu0
      %vm558 = vcmask 1040384
      %v559 = vrot.slane %v467, 7
      %v560 = vrot.slane %v470, 7
      %v561 = vsel %vm558, %v559, %v560
      %v562 = vrot.slane %v473, 7
      %v563 = vsel %vm558, %v560, %v562
      %v564 = vrot.slane %v476, 7
      %v565 = vsel %vm558, %v562, %v564
      %v570 = vsel %vm558, 0.0, %v559
      %vm575 = vcmask 1046528
      %v576 = vrot.slane %v543, 1
      %v577 = vrot.slane %v546, 1
      %v578 = vsel %vm575, %v576, %v577
      %v579 = vrot.slane %v549, 1
      %v580 = vsel %vm575, %v577, %v579
      %v581 = vrot.slane %v552, 1
      %v582 = vsel %vm575, %v579, %v581
      %v587 = vsel %vm575, %v581, 0.0
      %vm588 = vcmp.eq.s32.totalorder %v406, 0
      %vm589 = vcmp.eq.s32.totalorder %v407, 0
      %vm590 = vcmp.eq.s32.totalorder %v408, 0
      %vm591 = vcmp.eq.s32.totalorder %v409, 0
      %v592 = vsel %vm588, 0.0, %v570
      %v593 = vsel %vm589, 0.0, %v561
      %v594 = vsel %vm590, 0.0, %v563
      %v595 = vsel %vm591, 0.0, %v565
      %vm596 = vcmp.eq.s32.totalorder %v406, 15
      %vm597 = vcmp.eq.s32.totalorder %v407, 15
      %vm598 = vcmp.eq.s32.totalorder %v408, 15
      %vm599 = vcmp.eq.s32.totalorder %v409, 15
      %v600 = vsel %vm596, 0.0, %v578
      %v601 = vsel %vm597, 0.0, %v580
      %v602 = vsel %vm598, 0.0, %v582
      %v603 = vsel %vm599, 0.0, %v587
      %v604 = vadd.f32 %v592, %v505
      %v605 = vadd.f32 %v593, %v508
      %v606 = vadd.f32 %v594, %v511
      %v607 = vadd.f32 %v595, %v514
      %v608 = vadd.f32 %v604, %v600
      %v609 = vadd.f32 %v605, %v601
      %v610 = vadd.f32 %v606, %v602
      %v611 = vadd.f32 %v607, %v603
      %v612 = vperm.slane %v356, 0
      %v613 = vadd.f32 %v608, %v612
      %v614 = vadd.f32 %v609, %v612
      %v615 = vadd.f32 %v610, %v612
      %v616 = vadd.f32 %v611, %v612
      %v617 = vadd.f32 %v613, %v614
      %v618 = vrot.slane %v617, 4
      %v619 = vadd.f32 %v617, %v618
      %v620 = vrot.slane %v619, 2
      %v621 = vadd.f32 %v619, %v620
      %v622 = vrot.slane %v621, 1
      %v623 = vadd.f32 %v621, %v622
      %v624 = vadd.f32 %v615, %v616
      %v625 = vrot.slane %v624, 4
      %v626 = vadd.f32 %v624, %v625
      %v627 = vrot.slane %v626, 2
      %v628 = vadd.f32 %v626, %v627
      %v629 = vrot.slane %v628, 1
      %v630 = vadd.f32 %v628, %v629
      %v631 = vmul.f32 %v613, %v613
      %v632 = vmul.f32 %v614, %v614
      %v633 = vmul.f32 %v615, %v615
      %v634 = vmul.f32 %v616, %v616
      %v635 = vadd.f32 %v631, %v632
      %v636 = vrot.slane %v635, 4
      %v637 = vadd.f32 %v635, %v636
      %v638 = vrot.slane %v637, 2
      %v639 = vadd.f32 %v637, %v638
      %v640 = vrot.slane %v639, 1
      %v641 = vadd.f32 %v639, %v640
      %v642 = vadd.f32 %v633, %v634
      %v643 = vrot.slane %v642, 4
      %v644 = vadd.f32 %v642, %v643
      %v645 = vrot.slane %v644, 2
      %v646 = vadd.f32 %v644, %v645
      %v647 = vrot.slane %v646, 1
      %v648 = vadd.f32 %v646, %v647
      %vm651 = vcmask 1041409
      %v652 = vsel %vm651, %v630, %v623
      %654 = vrot.lane.b32.xlu0 %v652, 8
      %v655 = vpop.permute.xlu0 %654
      %v657 = vrot.slane %v655, 1
      %v660 = vadd.f32 %v623, %v655
      %v661 = vadd.f32 %v630, %v657
      %v664 = vsel %vm651, %v648, %v641
      %666 = vrot.lane.b32.xlu0 %v664, 8
      %v667 = vpop.permute.xlu0 %666
      %v669 = vrot.slane %v667, 1
      %v672 = vadd.f32 %v641, %v667
      %v673 = vadd.f32 %v648, %v669
      %v676 = vrot.slane %v661, 7
      %v677 = vsel %vm651, %v676, %v660
      %679 = vrot.lane.b32.xlu0 %v677, 16
      %v680 = vpop.permute.xlu0 %679
      %v682 = vrot.slane %v680, 1
      %v685 = vadd.f32 %v660, %v680
      %v686 = vadd.f32 %v661, %v682
      %v689 = vrot.slane %v673, 7
      %v690 = vsel %vm651, %v689, %v672
      %692 = vrot.lane.b32.xlu0 %v690, 16
      %v693 = vpop.permute.xlu0 %692
      %v695 = vrot.slane %v693, 1
      %v698 = vadd.f32 %v672, %v693
      %v699 = vadd.f32 %v673, %v695
      %v702 = vrot.slane %v686, 7
      %v703 = vsel %vm651, %v702, %v685
      %705 = vrot.lane.b32.xlu0 %v703, 32
      %v706 = vpop.permute.xlu0 %705
      %v708 = vrot.slane %v706, 1
      %v711 = vadd.f32 %v685, %v706
      %v712 = vadd.f32 %v686, %v708
      %v715 = vrot.slane %v699, 7
      %v716 = vsel %vm651, %v715, %v698
      %718 = vrot.lane.b32.xlu0 %v716, 32
      %v719 = vpop.permute.xlu0 %718
      %v721 = vrot.slane %v719, 1
      %v724 = vadd.f32 %v698, %v719
      %v725 = vadd.f32 %v699, %v721
      %v728 = vrot.slane %v712, 7
      %v729 = vsel %vm651, %v728, %v711
      %731 = vrot.lane.b32.xlu0 %v729, 64
      %v732 = vpop.permute.xlu0 %731
      %v734 = vrot.slane %v732, 1
      %v737 = vadd.f32 %v711, %v732
      %v738 = vadd.f32 %v712, %v734
      %v741 = vrot.slane %v725, 7
      %v742 = vsel %vm651, %v741, %v724
      %744 = vrot.lane.b32.xlu0 %v742, 64
      %v745 = vpop.permute.xlu0 %744
      %v747 = vrot.slane %v745, 1
      %v750 = vadd.f32 %v724, %v745
      %v751 = vadd.f32 %v725, %v747
      %v752 = vmul.f32 %v737, 0.00390625
      %v753 = vmul.f32 %v738, 0.00390625
      %v754 = vmul.f32 %v750, 0.00390625
      %v755 = vmul.f32 %v751, 0.00390625
      %v756 = vmul.f32 %v752, %v752
      %v757 = vmul.f32 %v753, %v753
      %v758 = vsub.f32 %v754, %v756
      %v759 = vsub.f32 %v755, %v757
      %v760 = vmax.f32 %v758, 0.0
      %v761 = vmax.f32 %v759, 0.0
      %v762 = vperm.slane %v752, 0
      %v763 = vperm.slane %v753, 0
      %v764 = vsub.f32 %v613, %v762
      %v765 = vsub.f32 %v614, %v762
      %v766 = vsub.f32 %v615, %v763
      %v767 = vsub.f32 %v616, %v763
      %v768 = vadd.f32 %v760, 1e-05
      %v769 = vadd.f32 %v761, 1e-05
      %v770 = vrsqrt.pop %v768
      %v771 = vmul.f32 %v770, %v768
      %v772 = vmul.f32 %v771, %v770
      %v773 = vmul.f32 0.5, %v772
      %v774 = vsub.f32 1.5, %v773
      %v775 = vmul.f32 %v770, %v774
      %vm776 = vweird.f32 %v768
      %vm777 = vweird.f32 %v770
      %vm778 = vmor %vm776, %vm777
      %v779 = vsel %vm778, %v770, %v775
      %v780 = vrsqrt.pop %v769
      %v781 = vmul.f32 %v780, %v769
      %v782 = vmul.f32 %v781, %v780
      %v783 = vmul.f32 0.5, %v782
      %v784 = vsub.f32 1.5, %v783
      %v785 = vmul.f32 %v780, %v784
      %vm786 = vweird.f32 %v769
      %vm787 = vweird.f32 %v780
      %vm788 = vmor %vm786, %vm787
      %v789 = vsel %vm788, %v780, %v785
      %v790 = vperm.slane %v779, 0
      %v791 = vperm.slane %v789, 0
      %v792 = vmul.f32 %v764, %v790
      %v793 = vmul.f32 %v765, %v790
      %v794 = vmul.f32 %v766, %v791
      %v795 = vmul.f32 %v767, %v791
      %vm796 = vcmp.ge.f32.partialorder %v792, 0.0
      %vm797 = vcmp.ge.f32.partialorder %v793, 0.0
      %vm798 = vcmp.ge.f32.partialorder %v794, 0.0
      %vm799 = vcmp.ge.f32.partialorder %v795, 0.0
      %v800 = vmul.f32 %v792, 0.01
      %v801 = vmul.f32 %v793, 0.01
      %v802 = vmul.f32 %v794, 0.01
      %v803 = vmul.f32 %v795, 0.01
      %v804 = vsel %vm796, %v792, %v800
      %v805 = vsel %vm797, %v793, %v801
      %v806 = vsel %vm798, %v794, %v802
      %v807 = vsel %vm799, %v795, %v803
      %v808 = vld [vmem:[%s340] sm:$0x3]
      %v809 = vld [vmem:[%s340 + $0x2] sm:$0x3]
      %v810 = vld [vmem:[%s347] sm:$0xff]
      %v811 = vld [vmem:[%s347 + $0x8] sm:$0xff]
      %v812 = vld [vmem:[%s347 + $0x10] sm:$0xff]
      %v813 = vld [vmem:[%s347 + $0x18] sm:$0xff]
      %v814 = vadd.f32 %v804, %v810
      %v815 = vadd.f32 %v805, %v811
      %v816 = vadd.f32 %v806, %v812
      %v817 = vadd.f32 %v807, %v813
      %v818 = vperm.slane %v808, 1
      %v819 = vperm.slane %v809, 1
      %v820 = vmul.f32 %v814, %v818
      %v821 = vmul.f32 %v815, %v818
      %v822 = vmul.f32 %v816, %v819
      %v823 = vmul.f32 %v817, %v819
      %v824 = vperm.slane %v808, 0
      %v825 = vperm.slane %v809, 0
      %v826 = vadd.f32 %v820, %v824
      %v827 = vadd.f32 %v821, %v824
      %v828 = vadd.f32 %v822, %v825
      %v829 = vadd.f32 %v823, %v825
      %v830 = vld [vmem:[%s5] sm:$0xff]
      %v831 = vld [vmem:[%s5 + $0x8] sm:$0xff]
      %v832 = vld [vmem:[%s5 + $0x10] sm:$0xff]
      %v833 = vld [vmem:[%s5 + $0x18] sm:$0xff]
      %v834 = vld [vmem:[%s5 + $0x20] sm:$0xff]
      %v835 = vld [vmem:[%s5 + $0x28] sm:$0xff]
      %v836 = vld [vmem:[%s5 + $0x30] sm:$0xff]
      %v837 = vld [vmem:[%s5 + $0x38] sm:$0xff]
      %v838 = vld [vmem:[%s5 + $0x40] sm:$0xff]
      %v839 = vld [vmem:[%s5 + $0x48] sm:$0xff]
      %v840 = vld [vmem:[%s5 + $0x50] sm:$0xff]
      %v841 = vld [vmem:[%s5 + $0x58] sm:$0xff]
      %v842 = vld [vmem:[%s5 + $0x60] sm:$0xff]
      %v843 = vld [vmem:[%s5 + $0x68] sm:$0xff]
      %v844 = vld [vmem:[%s5 + $0x70] sm:$0xff]
      %v845 = vld [vmem:[%s5 + $0x78] sm:$0xff]
      %846 = vmatpush.msra.mxu0 %v845
      %847 = vmatpush.msra.mxu0 %v844
      %848 = vmatpush.msra.mxu0 %v843
      %849 = vmatpush.msra.mxu0 %v842
      %850 = vmatpush.msra.mxu0 %v841
      %851 = vmatpush.msra.mxu0 %v840
      %852 = vmatpush.msra.mxu0 %v839
      %853 = vmatpush.msra.mxu0 %v838
      %854 = vmatpush.msra.mxu0 %v837
      %855 = vmatpush.msra.mxu0 %v836
      %856 = vmatpush.msra.mxu0 %v835
      %857 = vmatpush.msra.mxu0 %v834
      %858 = vmatpush.msra.mxu0 %v833
      %859 = vmatpush.msra.mxu0 %v832
      %860 = vmatpush.msra.mxu0 %v831
      %861 = vmatpush.msra.mxu0 %v830
      %862 = vmatmul.f32.gmra.mxu0 %v826
      %v863 = vpop.f32.mrf.mxu0
      %v864 = vadd.f32 0.0, %v863
      %865 = vmatmul.f32.gmra.mxu0 %v827
      %v866 = vpop.f32.mrf.mxu0
      %v867 = vadd.f32 0.0, %v866
      %868 = vmatmul.f32.gmra.mxu0 %v828
      %v869 = vpop.f32.mrf.mxu0
      %v870 = vadd.f32 0.0, %v869
      %871 = vmatmul.f32.gmra.mxu0 %v829
      %v872 = vpop.f32.mrf.mxu0
      %v873 = vadd.f32 0.0, %v872
      %874 = vdwg.mxu0
      %s875 = scalar_lea.vmem %s5, 128
      %v876 = vld [vmem:[%s875] sm:$0xff]
      %v877 = vld [vmem:[%s875 + $0x8] sm:$0xff]
      %v878 = vld [vmem:[%s875 + $0x10] sm:$0xff]
      %v879 = vld [vmem:[%s875 + $0x18] sm:$0xff]
      %v880 = vld [vmem:[%s875 + $0x20] sm:$0xff]
      %v881 = vld [vmem:[%s875 + $0x28] sm:$0xff]
      %v882 = vld [vmem:[%s875 + $0x30] sm:$0xff]
      %v883 = vld [vmem:[%s875 + $0x38] sm:$0xff]
      %v884 = vld [vmem:[%s875 + $0x40] sm:$0xff]
      %v885 = vld [vmem:[%s875 + $0x48] sm:$0xff]
      %v886 = vld [vmem:[%s875 + $0x50] sm:$0xff]
      %v887 = vld [vmem:[%s875 + $0x58] sm:$0xff]
      %v888 = vld [vmem:[%s875 + $0x60] sm:$0xff]
      %v889 = vld [vmem:[%s875 + $0x68] sm:$0xff]
      %v890 = vld [vmem:[%s875 + $0x70] sm:$0xff]
      %v891 = vld [vmem:[%s875 + $0x78] sm:$0xff]
      %892 = vmatpush.msra.mxu0 %v891
      %893 = vmatpush.msra.mxu0 %v890
      %894 = vmatpush.msra.mxu0 %v889
      %895 = vmatpush.msra.mxu0 %v888
      %896 = vmatpush.msra.mxu0 %v887
      %897 = vmatpush.msra.mxu0 %v886
      %898 = vmatpush.msra.mxu0 %v885
      %899 = vmatpush.msra.mxu0 %v884
      %900 = vmatpush.msra.mxu0 %v883
      %901 = vmatpush.msra.mxu0 %v882
      %902 = vmatpush.msra.mxu0 %v881
      %903 = vmatpush.msra.mxu0 %v880
      %904 = vmatpush.msra.mxu0 %v879
      %905 = vmatpush.msra.mxu0 %v878
      %906 = vmatpush.msra.mxu0 %v877
      %907 = vmatpush.msra.mxu0 %v876
      %908 = vmatmul.f32.gmra.mxu0 %v826
      %v909 = vpop.f32.mrf.mxu0
      %v910 = vadd.f32 0.0, %v909
      %911 = vmatmul.f32.gmra.mxu0 %v827
      %v912 = vpop.f32.mrf.mxu0
      %v913 = vadd.f32 0.0, %v912
      %914 = vmatmul.f32.gmra.mxu0 %v828
      %v915 = vpop.f32.mrf.mxu0
      %v916 = vadd.f32 0.0, %v915
      %917 = vmatmul.f32.gmra.mxu0 %v829
      %v918 = vpop.f32.mrf.mxu0
      %v919 = vadd.f32 0.0, %v918
      %920 = vdwg.mxu0
      %s921 = scalar_lea.vmem %s5, 256
      %v922 = vld [vmem:[%s921] sm:$0xff]
      %v923 = vld [vmem:[%s921 + $0x8] sm:$0xff]
      %v924 = vld [vmem:[%s921 + $0x10] sm:$0xff]
      %v925 = vld [vmem:[%s921 + $0x18] sm:$0xff]
      %v926 = vld [vmem:[%s921 + $0x20] sm:$0xff]
      %v927 = vld [vmem:[%s921 + $0x28] sm:$0xff]
      %v928 = vld [vmem:[%s921 + $0x30] sm:$0xff]
      %v929 = vld [vmem:[%s921 + $0x38] sm:$0xff]
      %v930 = vld [vmem:[%s921 + $0x40] sm:$0xff]
      %v931 = vld [vmem:[%s921 + $0x48] sm:$0xff]
      %v932 = vld [vmem:[%s921 + $0x50] sm:$0xff]
      %v933 = vld [vmem:[%s921 + $0x58] sm:$0xff]
      %v934 = vld [vmem:[%s921 + $0x60] sm:$0xff]
      %v935 = vld [vmem:[%s921 + $0x68] sm:$0xff]
      %v936 = vld [vmem:[%s921 + $0x70] sm:$0xff]
      %v937 = vld [vmem:[%s921 + $0x78] sm:$0xff]
      %938 = vmatpush.msra.mxu0 %v937
      %939 = vmatpush.msra.mxu0 %v936
      %940 = vmatpush.msra.mxu0 %v935
      %941 = vmatpush.msra.mxu0 %v934
      %942 = vmatpush.msra.mxu0 %v933
      %943 = vmatpush.msra.mxu0 %v932
      %944 = vmatpush.msra.mxu0 %v931
      %945 = vmatpush.msra.mxu0 %v930
      %946 = vmatpush.msra.mxu0 %v929
      %947 = vmatpush.msra.mxu0 %v928
      %948 = vmatpush.msra.mxu0 %v927
      %949 = vmatpush.msra.mxu0 %v926
      %950 = vmatpush.msra.mxu0 %v925
      %951 = vmatpush.msra.mxu0 %v924
      %952 = vmatpush.msra.mxu0 %v923
      %953 = vmatpush.msra.mxu0 %v922
      %954 = vmatmul.f32.gmra.mxu0 %v826
      %v955 = vpop.f32.mrf.mxu0
      %v956 = vadd.f32 0.0, %v955
      %957 = vmatmul.f32.gmra.mxu0 %v827
      %v958 = vpop.f32.mrf.mxu0
      %v959 = vadd.f32 0.0, %v958
      %960 = vmatmul.f32.gmra.mxu0 %v828
      %v961 = vpop.f32.mrf.mxu0
      %v962 = vadd.f32 0.0, %v961
      %963 = vmatmul.f32.gmra.mxu0 %v829
      %v964 = vpop.f32.mrf.mxu0
      %v965 = vadd.f32 0.0, %v964
      %966 = vdwg.mxu0
      %v971 = vrot.slane %v864, 7
      %v972 = vrot.slane %v867, 7
      %v973 = vsel %vm558, %v971, %v972
      %v974 = vrot.slane %v870, 7
      %v975 = vsel %vm558, %v972, %v974
      %v976 = vrot.slane %v873, 7
      %v977 = vsel %vm558, %v974, %v976
      %v982 = vsel %vm558, 0.0, %v971
      %v987 = vrot.slane %v956, 1
      %v988 = vrot.slane %v959, 1
      %v989 = vsel %vm575, %v987, %v988
      %v990 = vrot.slane %v962, 1
      %v991 = vsel %vm575, %v988, %v990
      %v992 = vrot.slane %v965, 1
      %v993 = vsel %vm575, %v990, %v992
      %v998 = vsel %vm575, %v992, 0.0
      %v999 = vsel %vm588, 0.0, %v982
      %v1000 = vsel %vm589, 0.0, %v973
      %v1001 = vsel %vm590, 0.0, %v975
      %v1002 = vsel %vm591, 0.0, %v977
      %v1003 = vsel %vm596, 0.0, %v989
      %v1004 = vsel %vm597, 0.0, %v991
      %v1005 = vsel %vm598, 0.0, %v993
      %v1006 = vsel %vm599, 0.0, %v998
      %v1007 = vadd.f32 %v999, %v910
      %v1008 = vadd.f32 %v1000, %v913
      %v1009 = vadd.f32 %v1001, %v916
      %v1010 = vadd.f32 %v1002, %v919
      %v1011 = vadd.f32 %v1007, %v1003
      %v1012 = vadd.f32 %v1008, %v1004
      %v1013 = vadd.f32 %v1009, %v1005
      %v1014 = vadd.f32 %v1010, %v1006
      %v1015 = vperm.slane %v356, 1
      %v1016 = vadd.f32 %v1011, %v1015
      %v1017 = vadd.f32 %v1012, %v1015
      %v1018 = vadd.f32 %v1013, %v1015
      %v1019 = vadd.f32 %v1014, %v1015
      %v1020 = vadd.f32 %v1016, %v1017
      %v1021 = vrot.slane %v1020, 4
      %v1022 = vadd.f32 %v1020, %v1021
      %v1023 = vrot.slane %v1022, 2
      %v1024 = vadd.f32 %v1022, %v1023
      %v1025 = vrot.slane %v1024, 1
      %v1026 = vadd.f32 %v1024, %v1025
      %v1027 = vadd.f32 %v1018, %v1019
      %v1028 = vrot.slane %v1027, 4
      %v1029 = vadd.f32 %v1027, %v1028
      %v1030 = vrot.slane %v1029, 2
      %v1031 = vadd.f32 %v1029, %v1030
      %v1032 = vrot.slane %v1031, 1
      %v1033 = vadd.f32 %v1031, %v1032
      %v1034 = vmul.f32 %v1016, %v1016
      %v1035 = vmul.f32 %v1017, %v1017
      %v1036 = vmul.f32 %v1018, %v1018
      %v1037 = vmul.f32 %v1019, %v1019
      %v1038 = vadd.f32 %v1034, %v1035
      %v1039 = vrot.slane %v1038, 4
      %v1040 = vadd.f32 %v1038, %v1039
      %v1041 = vrot.slane %v1040, 2
      %v1042 = vadd.f32 %v1040, %v1041
      %v1043 = vrot.slane %v1042, 1
      %v1044 = vadd.f32 %v1042, %v1043
      %v1045 = vadd.f32 %v1036, %v1037
      %v1046 = vrot.slane %v1045, 4
      %v1047 = vadd.f32 %v1045, %v1046
      %v1048 = vrot.slane %v1047, 2
      %v1049 = vadd.f32 %v1047, %v1048
      %v1050 = vrot.slane %v1049, 1
      %v1051 = vadd.f32 %v1049, %v1050
      %v1054 = vsel %vm651, %v1033, %v1026
      %1056 = vrot.lane.b32.xlu0 %v1054, 8
      %v1057 = vpop.permute.xlu0 %1056
      %v1059 = vrot.slane %v1057, 1
      %v1062 = vadd.f32 %v1026, %v1057
      %v1063 = vadd.f32 %v1033, %v1059
      %v1066 = vsel %vm651, %v1051, %v1044
      %1068 = vrot.lane.b32.xlu0 %v1066, 8
      %v1069 = vpop.permute.xlu0 %1068
      %v1071 = vrot.slane %v1069, 1
      %v1074 = vadd.f32 %v1044, %v1069
      %v1075 = vadd.f32 %v1051, %v1071
      %v1078 = vrot.slane %v1063, 7
      %v1079 = vsel %vm651, %v1078, %v1062
      %1081 = vrot.lane.b32.xlu0 %v1079, 16
      %v1082 = vpop.permute.xlu0 %1081
      %v1084 = vrot.slane %v1082, 1
      %v1087 = vadd.f32 %v1062, %v1082
      %v1088 = vadd.f32 %v1063, %v1084
      %v1091 = vrot.slane %v1075, 7
      %v1092 = vsel %vm651, %v1091, %v1074
      %1094 = vrot.lane.b32.xlu0 %v1092, 16
      %v1095 = vpop.permute.xlu0 %1094
      %v1097 = vrot.slane %v1095, 1
      %v1100 = vadd.f32 %v1074, %v1095
      %v1101 = vadd.f32 %v1075, %v1097
      %v1104 = vrot.slane %v1088, 7
      %v1105 = vsel %vm651, %v1104, %v1087
      %1107 = vrot.lane.b32.xlu0 %v1105, 32
      %v1108 = vpop.permute.xlu0 %1107
      %v1110 = vrot.slane %v1108, 1
      %v1113 = vadd.f32 %v1087, %v1108
      %v1114 = vadd.f32 %v1088, %v1110
      %v1117 = vrot.slane %v1101, 7
      %v1118 = vsel %vm651, %v1117, %v1100
      %1120 = vrot.lane.b32.xlu0 %v1118, 32
      %v1121 = vpop.permute.xlu0 %1120
      %v1123 = vrot.slane %v1121, 1
      %v1126 = vadd.f32 %v1100, %v1121
      %v1127 = vadd.f32 %v1101, %v1123
      %v1130 = vrot.slane %v1114, 7
      %v1131 = vsel %vm651, %v1130, %v1113
      %1133 = vrot.lane.b32.xlu0 %v1131, 64
      %v1134 = vpop.permute.xlu0 %1133
      %v1136 = vrot.slane %v1134, 1
      %v1139 = vadd.f32 %v1113, %v1134
      %v1140 = vadd.f32 %v1114, %v1136
      %v1143 = vrot.slane %v1127, 7
      %v1144 = vsel %vm651, %v1143, %v1126
      %1146 = vrot.lane.b32.xlu0 %v1144, 64
      %v1147 = vpop.permute.xlu0 %1146
      %v1149 = vrot.slane %v1147, 1
      %v1152 = vadd.f32 %v1126, %v1147
      %v1153 = vadd.f32 %v1127, %v1149
      %v1154 = vmul.f32 %v1139, 0.00390625
      %v1155 = vmul.f32 %v1140, 0.00390625
      %v1156 = vmul.f32 %v1152, 0.00390625
      %v1157 = vmul.f32 %v1153, 0.00390625
      %v1158 = vmul.f32 %v1154, %v1154
      %v1159 = vmul.f32 %v1155, %v1155
      %v1160 = vsub.f32 %v1156, %v1158
      %v1161 = vsub.f32 %v1157, %v1159
      %v1162 = vmax.f32 %v1160, 0.0
      %v1163 = vmax.f32 %v1161, 0.0
      %v1164 = vperm.slane %v1154, 0
      %v1165 = vperm.slane %v1155, 0
      %v1166 = vsub.f32 %v1016, %v1164
      %v1167 = vsub.f32 %v1017, %v1164
      %v1168 = vsub.f32 %v1018, %v1165
      %v1169 = vsub.f32 %v1019, %v1165
      %v1170 = vadd.f32 %v1162, 1e-05
      %v1171 = vadd.f32 %v1163, 1e-05
      %v1172 = vrsqrt.pop %v1170
      %v1173 = vmul.f32 %v1172, %v1170
      %v1174 = vmul.f32 %v1173, %v1172
      %v1175 = vmul.f32 0.5, %v1174
      %v1176 = vsub.f32 1.5, %v1175
      %v1177 = vmul.f32 %v1172, %v1176
      %vm1178 = vweird.f32 %v1170
      %vm1179 = vweird.f32 %v1172
      %vm1180 = vmor %vm1178, %vm1179
      %v1181 = vsel %vm1180, %v1172, %v1177
      %v1182 = vrsqrt.pop %v1171
      %v1183 = vmul.f32 %v1182, %v1171
      %v1184 = vmul.f32 %v1183, %v1182
      %v1185 = vmul.f32 0.5, %v1184
      %v1186 = vsub.f32 1.5, %v1185
      %v1187 = vmul.f32 %v1182, %v1186
      %vm1188 = vweird.f32 %v1171
      %vm1189 = vweird.f32 %v1182
      %vm1190 = vmor %vm1188, %vm1189
      %v1191 = vsel %vm1190, %v1182, %v1187
      %v1192 = vperm.slane %v1181, 0
      %v1193 = vperm.slane %v1191, 0
      %v1194 = vmul.f32 %v1166, %v1192
      %v1195 = vmul.f32 %v1167, %v1192
      %v1196 = vmul.f32 %v1168, %v1193
      %v1197 = vmul.f32 %v1169, %v1193
      %vm1198 = vcmp.ge.f32.partialorder %v1194, 0.0
      %vm1199 = vcmp.ge.f32.partialorder %v1195, 0.0
      %vm1200 = vcmp.ge.f32.partialorder %v1196, 0.0
      %vm1201 = vcmp.ge.f32.partialorder %v1197, 0.0
      %v1202 = vmul.f32 %v1194, 0.01
      %v1203 = vmul.f32 %v1195, 0.01
      %v1204 = vmul.f32 %v1196, 0.01
      %v1205 = vmul.f32 %v1197, 0.01
      %v1206 = vsel %vm1198, %v1194, %v1202
      %v1207 = vsel %vm1199, %v1195, %v1203
      %v1208 = vsel %vm1200, %v1196, %v1204
      %v1209 = vsel %vm1201, %v1197, %v1205
      %1210 = vst [vmem:[%s354] sm:$0xff] %v1206
      %1211 = vst [vmem:[%s354 + $0x8] sm:$0xff] %v1207
      %1212 = vst [vmem:[%s354 + $0x10] sm:$0xff] %v1208
      %1213 = vst [vmem:[%s354 + $0x18] sm:$0xff] %v1209
      %s1214 = smul.u32 2, %s18
      %p1215 = scmp.lt.s32.totalorder %s1214, 3
      %s1216 = scalar_select %p1215, %s1214, 3
      %s1217 = smul.addr %s1216, 2
      %s1218 = smul.addr %s1217, 8
      %s1219 = scalar_lea.vmem %s7, %s1218
      // Predicated region
      $region49: #{style_block_forward.1} parent=47 // pred_check
        %p1220 = pneg %p203
      $region50: #{style_block_forward.1} parent=47 // pred_check_branch
        %1222 = sbr.rel (%p1220) target = $region52
      $region51: #{style_block_forward.1} parent=47 // pred_region
        %s1223 = smul.u32 2, %s18
      $region52: #{style_block_forward.1} parent=47 // pred_fallthru
        _
    $region48: #{style_block_forward.1} parent=5 // pred_fallthru
      _
    %p1224 = scmp.le.s32.totalorder 2, %s13
    // Predicated region
    $region53: #{style_block_forward.1} parent=5 // pred_check
      %p1225 = pneg %p1224
    $region54: #{style_block_forward.1} parent=5 // pred_check_branch
      %1227 = sbr.rel (%p1225) target = $region56
    $region55: #{style_block_forward.1} parent=5 // pred_region
      %s1228 = ssub.s32 %s13, 2
      // Predicated region
      $region57: #{style_block_forward.1} parent=55 // pred_check
        %p1229 = pneg %p209
      $region58: #{style_block_forward.1} parent=55 // pred_check_branch
        %1231 = sbr.rel (%p1229) target = $region60
      $region59: #{style_block_forward.1} parent=55 // pred_region
        %s1232 = smul.u32 2, %s19
        %p1233 = scmp.lt.s32.totalorder %s1232, 3
        %s1234 = scalar_select %p1233, %s1232, 3
        %s1235 = smul.addr %s1234, 2
        %s1236 = smul.addr %s1235, 8
        %s1237 = scalar_lea.vmem %s7, %s1236
      $region60: #{style_block_forward.1} parent=55 // pred_fallthru
        _
    $region56: #{style_block_forward.1} parent=5 // pred_fallthru
      _
  $region6: #{style_block_forward.1} parent=0 // loop_footer
    %s17 = sadd.s32 1, %s13
  $region7: #{style_block_forward.1} parent=0 // loop_footer_branch
    %12 = sbr.rel target = $region3
  $region8: #{style_block_forward.1} parent=0 // loop_exit
    _

</llo_original>
